<compile_context>
chip_gen: v7x
topology: tpu7x:2x2x1
jax: 0.10.0
libtpu: 0.0.40
codegen_flags: <defaults>
</compile_context>

<pallas_src>
import functools

import jax
import jax.numpy as jnp
from jax import lax
from jax.experimental import pallas as pl
from jax.experimental.pallas import tpu as pltpu


def _gnn_kernel(src_ref, dst_ref, dst_t_ref, x_ref,
                w1_ref, att1_ref, b1_ref,
                w2_ref, att2_ref, b2_ref,
                out_ref, alpha_ref, *, heads):
    """Fused 2-layer GAT forward, fully VMEM-resident (everything is tiny)."""
    H = heads
    E = src_ref.shape[0]
    N = x_ref.shape[0]

    # ---- build gather/scatter one-hot matrices in-kernel from int32 edge lists ----
    src_col = src_ref[...]                                    # [E, 1] int32
    dst_col = dst_ref[...]                                    # [E, 1] int32
    dst_row = dst_t_ref[...]                                  # [1, E] int32

    col_n = lax.broadcasted_iota(jnp.int32, (E, N), 1)
    so = (col_n == src_col).astype(jnp.float32)               # [E, N] src one-hot
    do = (col_n == dst_col).astype(jnp.float32)               # [E, N] dst one-hot
    # fused [so | do] gather matrix built directly (avoids a lane-dim concat)
    col_2n = lax.broadcasted_iota(jnp.int32, (E, 2 * N), 1)
    sd = ((col_2n == src_col) | (col_2n == (dst_col + N))).astype(jnp.float32)  # [E, 2N]
    row_n = lax.broadcasted_iota(jnp.int32, (N, E), 0)
    do_t = (row_n == dst_row).astype(jnp.float32)             # [N, E] dst one-hot^T

    def gat(x, w_ref, att_ref, b_ref, apply_elu):
        HC = w_ref.shape[1]
        C = HC // H

        xp = jnp.dot(x, w_ref[...], preferred_element_type=jnp.float32)        # [N, HC]

        # per-node attention logits for src & dst roles in ONE narrow matmul
        a_all = jnp.dot(xp, att_ref[...], preferred_element_type=jnp.float32)  # [N, 2H]
        a2 = jnp.concatenate([a_all[:, :H], a_all[:, H:]], axis=0)             # [2N, H]

        # per-edge logits: e = so@a_src + do@a_dst fused into one matmul
        e = jnp.dot(sd, a2, preferred_element_type=jnp.float32)                # [E, H]
        e = jnp.where(e > 0, e, 0.2 * e)                                       # leaky_relu(0.2)

        # softmax grouped by destination node.
        # NOTE: stabilized with a per-head GLOBAL max — identical result to
        # PyG's per-group max unless a group's logits sit >~80 below the
        # global max (self-loops make that pathological case unlikely).
        e = e - jnp.max(e, axis=0, keepdims=True)
        p = jnp.exp(e)                                                         # [E, H]
        denom = jnp.dot(do_t, p, preferred_element_type=jnp.float32)           # [N, H]
        denom_e = jnp.dot(do, denom, preferred_element_type=jnp.float32)       # [E, H]
        alpha = p * pl.reciprocal(denom_e, approx=True)                        # [E, H]

        # aggregate messages: out[i] = concat_h( sum_{j->i} alpha[e,h]*xp[j,h,:] )
        xp_src = jnp.dot(so, xp, preferred_element_type=jnp.float32)           # [E, HC]
        # head-replication matrix rep[h, h*C + c] = 1, built in-kernel
        # (range compares — avoids integer division and an HBM input)
        j_col = lax.broadcasted_iota(jnp.int32, (H, HC), 1)
        h_row = lax.broadcasted_iota(jnp.int32, (H, HC), 0)
        rep = ((j_col >= h_row * C) & (j_col < (h_row + 1) * C)).astype(jnp.float32)
        alpha_exp = jnp.dot(alpha, rep, preferred_element_type=jnp.float32)    # [E, HC]

        out = jnp.dot(do_t, alpha_exp * xp_src, preferred_element_type=jnp.float32)
        out = out + b_ref[...]                                                 # bias [1, HC]
        if apply_elu:
            out = jnp.where(out > 0, out, jnp.exp(out) - 1.0)                  # F.elu
        return out, alpha

    h1, _ = gat(x_ref[...], w1_ref, att1_ref, b1_ref, apply_elu=True)
    out2, alpha2 = gat(h1, w2_ref, att2_ref, b2_ref, apply_elu=False)
    out_ref[...] = out2
    alpha_ref[...] = alpha2


class GNNPallas:
    """JAX/Pallas port of model.SubModel.GNN (two GATConv layers, one kernel)."""

    def __init__(self, input_dim=256, hidden_dim=32, output_dim=16, heads_num=8,
                 key=jax.random.PRNGKey(42)):
        self.heads = heads_num
        self.out_hc = output_dim * heads_num

        def init_layer(k, fin, c, h):
            kw, ks, kd = jax.random.split(k, 3)
            glorot = lambda kk, shape: (jax.random.normal(kk, shape, jnp.float32)
                                        * jnp.sqrt(2.0 / (shape[0] + shape[-1])))
            hc = h * c
            att_src = glorot(ks, (h, c))
            att_dst = glorot(kd, (h, c))
            # block-structured projection so the per-head reduction
            # (xp.reshape(N,H,C) * att).sum(-1) becomes a single [HC, 2H] matmul
            rep_t = jnp.repeat(jnp.eye(h, dtype=jnp.float32), c, axis=1).T      # [HC, H]
            att_cat = jnp.concatenate([att_src.reshape(hc, 1) * rep_t,
                                       att_dst.reshape(hc, 1) * rep_t], axis=1)  # [HC, 2H]
            return {
                "w": glorot(kw, (fin, hc)),              # torch lin.weight.T
                "att": att_cat,
                "bias": jnp.zeros((1, hc), jnp.float32),
            }

        k1, k2 = jax.random.split(key)
        self.p1 = init_layer(k1, input_dim, hidden_dim, heads_num)
        self.p2 = init_layer(k2, hidden_dim * heads_num, output_dim, heads_num)

    def __call__(self, x, edge_index, edge_attr=None):
        # GATConv(add_self_loops=True): append one self loop per node
        # (assumes the provided edge_index contains no self loops).
        N = x.shape[0]
        loops = jnp.arange(N, dtype=edge_index.dtype)
        src = jnp.concatenate([edge_index[0], loops]).astype(jnp.int32)
        dst = jnp.concatenate([edge_index[1], loops]).astype(jnp.int32)
        E = src.shape[0]

        kernel = functools.partial(_gnn_kernel, heads=self.heads)
        vmem = pl.BlockSpec(memory_space=pltpu.MemorySpace.VMEM)
        out, alpha = pl.pallas_call(
            kernel,
            out_shape=(jax.ShapeDtypeStruct((N, self.out_hc), jnp.float32),
                       jax.ShapeDtypeStruct((E, self.heads), jnp.float32)),
            in_specs=[vmem] * 10,
            out_specs=(vmem, vmem),
        )(src.reshape(E, 1), dst.reshape(E, 1), dst.reshape(1, E),
          x.astype(jnp.float32),
          self.p1["w"], self.p1["att"], self.p1["bias"],
          self.p2["w"], self.p2["att"], self.p2["bias"])
        return out, alpha


if __name__ == "__main__":
    key = jax.random.PRNGKey(0)
    N, E0 = 16, 32
    input_dim, hidden_dim, output_dim, heads = 256, 32, 16, 8

    kx, ks, ko, ka = jax.random.split(key, 4)
    x = jax.random.normal(kx, (N, input_dim), jnp.float32)
    src = jax.random.randint(ks, (E0,), 0, N)
    dst = (src + jax.random.randint(ko, (E0,), 1, N)) % N       # no self loops
    edge_index = jnp.stack([src, dst]).astype(jnp.int32)
    edge_attr = jax.random.normal(ka, (E0, 4), jnp.float32)     # ignored (edge_dim=None)

    model = GNNPallas(input_dim, hidden_dim, output_dim, heads,
                      key=jax.random.PRNGKey(42))
    out, alpha = model(x, edge_index, edge_attr)
    jax.block_until_ready((out, alpha))

    assert out.shape == (N, heads * output_dim), out.shape
    assert alpha.shape == (E0 + N, heads), alpha.shape
    assert bool(jnp.all(jnp.isfinite(out))) and bool(jnp.all(jnp.isfinite(alpha)))
    print("KERNEL_OK")
</pallas_src>

<mosaic_0001>
module attributes {stable_mosaic.version = 11 : i64} {
  func.func @_gnn_kernel(%arg0: memref<48x1xi32, #tpu.memory_space<vmem>>, %arg1: memref<48x1xi32, #tpu.memory_space<vmem>>, %arg2: memref<1x48xi32, #tpu.memory_space<vmem>>, %arg3: memref<16x256xf32, #tpu.memory_space<vmem>>, %arg4: memref<256x256xf32, #tpu.memory_space<vmem>>, %arg5: memref<256x16xf32, #tpu.memory_space<vmem>>, %arg6: memref<1x256xf32, #tpu.memory_space<vmem>>, %arg7: memref<256x128xf32, #tpu.memory_space<vmem>>, %arg8: memref<128x16xf32, #tpu.memory_space<vmem>>, %arg9: memref<1x128xf32, #tpu.memory_space<vmem>>, %arg10: memref<16x128xf32, #tpu.memory_space<vmem>>, %arg11: memref<48x8xf32, #tpu.memory_space<vmem>>) attributes {dimension_semantics = [], scalar_prefetch = 0 : i64, scratch_operands = 0 : i64, tpu.core_type = #tpu.core_type<tc>} {
    %c0 = arith.constant 0 : index
    %c0_0 = arith.constant 0 : index
    %0 = vector.load %arg0[%c0, %c0_0] : memref<48x1xi32, #tpu.memory_space<vmem>>, vector<48x1xi32>
    %c0_1 = arith.constant 0 : index
    %c0_2 = arith.constant 0 : index
    %1 = vector.load %arg1[%c0_1, %c0_2] : memref<48x1xi32, #tpu.memory_space<vmem>>, vector<48x1xi32>
    %c0_3 = arith.constant 0 : index
    %c0_4 = arith.constant 0 : index
    %2 = vector.load %arg2[%c0_3, %c0_4] : memref<1x48xi32, #tpu.memory_space<vmem>>, vector<1x48xi32>
    %3 = tpu.iota {dimensions = array<i32: 1>} : vector<48x16xi32>
    %4 = vector.broadcast %0 : vector<48x1xi32> to vector<48x16xi32>
    %5 = arith.cmpi eq, %3, %4 : vector<48x16xi32>
    %6 = arith.extui %5 : vector<48x16xi1> to vector<48x16xi32>
    %7 = arith.sitofp %6 : vector<48x16xi32> to vector<48x16xf32>
    %8 = vector.broadcast %1 : vector<48x1xi32> to vector<48x16xi32>
    %9 = arith.cmpi eq, %3, %8 : vector<48x16xi32>
    %10 = arith.extui %9 : vector<48x16xi1> to vector<48x16xi32>
    %11 = arith.sitofp %10 : vector<48x16xi32> to vector<48x16xf32>
    %12 = tpu.iota {dimensions = array<i32: 1>} : vector<48x32xi32>
    %13 = vector.broadcast %0 : vector<48x1xi32> to vector<48x32xi32>
    %14 = arith.cmpi eq, %12, %13 : vector<48x32xi32>
    %c16_i32 = arith.constant 16 : i32
    %15 = vector.broadcast %c16_i32 : i32 to vector<48x1xi32>
    %16 = arith.addi %1, %15 : vector<48x1xi32>
    %17 = vector.broadcast %16 : vector<48x1xi32> to vector<48x32xi32>
    %18 = arith.cmpi eq, %12, %17 : vector<48x32xi32>
    %19 = arith.ori %14, %18 : vector<48x32xi1>
    %20 = arith.extui %19 : vector<48x32xi1> to vector<48x32xi32>
    %21 = arith.sitofp %20 : vector<48x32xi32> to vector<48x32xf32>
    %22 = tpu.iota {dimensions = array<i32: 0>} : vector<16x48xi32>
    %23 = vector.broadcast %2 : vector<1x48xi32> to vector<16x48xi32>
    %24 = arith.cmpi eq, %22, %23 : vector<16x48xi32>
    %25 = arith.extui %24 : vector<16x48xi1> to vector<16x48xi32>
    %26 = arith.sitofp %25 : vector<16x48xi32> to vector<16x48xf32>
    %c0_5 = arith.constant 0 : index
    %c0_6 = arith.constant 0 : index
    %27 = vector.load %arg3[%c0_5, %c0_6] : memref<16x256xf32, #tpu.memory_space<vmem>>, vector<16x256xf32>
    %c0_7 = arith.constant 0 : index
    %c0_8 = arith.constant 0 : index
    %28 = vector.load %arg4[%c0_7, %c0_8] : memref<256x256xf32, #tpu.memory_space<vmem>>, vector<256x256xf32>
    %cst = arith.constant dense<0.000000e+00> : vector<16x256xf32>
    %29 = tpu.matmul %27, %28, %cst {dimension_numbers = #tpu.dot_dimension_numbers<[1], [0], [0], [1], [0, 0, 1, 1], [], []>} : vector<16x256xf32>, vector<256x256xf32>, vector<16x256xf32> -> vector<16x256xf32>
    %c0_9 = arith.constant 0 : index
    %c0_10 = arith.constant 0 : index
    %30 = vector.load %arg5[%c0_9, %c0_10] : memref<256x16xf32, #tpu.memory_space<vmem>>, vector<256x16xf32>
    %cst_11 = arith.constant dense<0.000000e+00> : vector<16x16xf32>
    %31 = tpu.matmul %29, %30, %cst_11 {dimension_numbers = #tpu.dot_dimension_numbers<[1], [0], [0], [1], [0, 0, 1, 1], [], []>} : vector<16x256xf32>, vector<256x16xf32>, vector<16x16xf32> -> vector<16x16xf32>
    %32 = vector.extract_strided_slice %31 {offsets = [0, 0], sizes = [16, 8], strides = [1, 1]} : vector<16x16xf32> to vector<16x8xf32>
    %33 = vector.extract_strided_slice %31 {offsets = [0, 8], sizes = [16, 8], strides = [1, 1]} : vector<16x16xf32> to vector<16x8xf32>
    %34 = tpu.concatenate %32, %33 in 0 : vector<16x8xf32>, vector<16x8xf32> -> vector<32x8xf32>
    %cst_12 = arith.constant dense<0.000000e+00> : vector<48x8xf32>
    %35 = tpu.matmul %21, %34, %cst_12 {dimension_numbers = #tpu.dot_dimension_numbers<[1], [0], [0], [1], [0, 0, 1, 1], [], []>} : vector<48x32xf32>, vector<32x8xf32>, vector<48x8xf32> -> vector<48x8xf32>
    %cst_13 = arith.constant 0.000000e+00 : f32
    %36 = vector.broadcast %cst_13 : f32 to vector<48x8xf32>
    %37 = arith.cmpf ogt, %35, %36 : vector<48x8xf32>
    %cst_14 = arith.constant 2.000000e-01 : f32
    %38 = vector.broadcast %cst_14 : f32 to vector<48x8xf32>
    %39 = arith.mulf %38, %35 : vector<48x8xf32>
    %40 = arith.select %37, %35, %39 : vector<48x8xi1>, vector<48x8xf32>
    %cst_15 = arith.constant dense<0xFF800000> : vector<8xf32>
    %41 = vector.multi_reduction <maximumf>, %40, %cst_15 [0] : vector<48x8xf32> to vector<8xf32>
    %42 = vector.shape_cast %41 : vector<8xf32> to vector<1x8xf32>
    %43 = vector.broadcast %42 : vector<1x8xf32> to vector<48x8xf32>
    %44 = arith.subf %40, %43 : vector<48x8xf32>
    %45 = math.exp %44 : vector<48x8xf32>
    %cst_16 = arith.constant dense<0.000000e+00> : vector<16x8xf32>
    %46 = tpu.matmul %26, %45, %cst_16 {dimension_numbers = #tpu.dot_dimension_numbers<[1], [0], [0], [1], [0, 0, 1, 1], [], []>} : vector<16x48xf32>, vector<48x8xf32>, vector<16x8xf32> -> vector<16x8xf32>
    %cst_17 = arith.constant dense<0.000000e+00> : vector<48x8xf32>
    %47 = tpu.matmul %11, %46, %cst_17 {dimension_numbers = #tpu.dot_dimension_numbers<[1], [0], [0], [1], [0, 0, 1, 1], [], []>} : vector<48x16xf32>, vector<16x8xf32>, vector<48x8xf32> -> vector<48x8xf32>
    %48 = tpu.reciprocal %47 {approx = true} : vector<48x8xf32> -> vector<48x8xf32>
    %49 = arith.mulf %45, %48 : vector<48x8xf32>
    %cst_18 = arith.constant dense<0.000000e+00> : vector<48x256xf32>
    %50 = tpu.matmul %7, %29, %cst_18 {dimension_numbers = #tpu.dot_dimension_numbers<[1], [0], [0], [1], [0, 0, 1, 1], [], []>} : vector<48x16xf32>, vector<16x256xf32>, vector<48x256xf32> -> vector<48x256xf32>
    %51 = tpu.iota {dimensions = array<i32: 1>} : vector<8x256xi32>
    %52 = tpu.iota {dimensions = array<i32: 0>} : vector<8x256xi32>
    %c32_i32 = arith.constant 32 : i32
    %53 = vector.broadcast %c32_i32 : i32 to vector<8x256xi32>
    %54 = arith.muli %52, %53 : vector<8x256xi32>
    %55 = arith.cmpi sge, %51, %54 : vector<8x256xi32>
    %c1_i32 = arith.constant 1 : i32
    %56 = vector.broadcast %c1_i32 : i32 to vector<8x256xi32>
    %57 = arith.addi %52, %56 : vector<8x256xi32>
    %c32_i32_19 = arith.constant 32 : i32
    %58 = vector.broadcast %c32_i32_19 : i32 to vector<8x256xi32>
    %59 = arith.muli %57, %58 : vector<8x256xi32>
    %60 = arith.cmpi slt, %51, %59 : vector<8x256xi32>
    %61 = arith.andi %55, %60 : vector<8x256xi1>
    %62 = arith.extui %61 : vector<8x256xi1> to vector<8x256xi32>
    %63 = arith.sitofp %62 : vector<8x256xi32> to vector<8x256xf32>
    %cst_20 = arith.constant dense<0.000000e+00> : vector<48x256xf32>
    %64 = tpu.matmul %49, %63, %cst_20 {dimension_numbers = #tpu.dot_dimension_numbers<[1], [0], [0], [1], [0, 0, 1, 1], [], []>} : vector<48x8xf32>, vector<8x256xf32>, vector<48x256xf32> -> vector<48x256xf32>
    %65 = arith.mulf %64, %50 : vector<48x256xf32>
    %cst_21 = arith.constant dense<0.000000e+00> : vector<16x256xf32>
    %66 = tpu.matmul %26, %65, %cst_21 {dimension_numbers = #tpu.dot_dimension_numbers<[1], [0], [0], [1], [0, 0, 1, 1], [], []>} : vector<16x48xf32>, vector<48x256xf32>, vector<16x256xf32> -> vector<16x256xf32>
    %c0_22 = arith.constant 0 : index
    %c0_23 = arith.constant 0 : index
    %67 = vector.load %arg6[%c0_22, %c0_23] : memref<1x256xf32, #tpu.memory_space<vmem>>, vector<1x256xf32>
    %68 = vector.broadcast %67 : vector<1x256xf32> to vector<16x256xf32>
    %69 = arith.addf %66, %68 : vector<16x256xf32>
    %cst_24 = arith.constant 0.000000e+00 : f32
    %70 = vector.broadcast %cst_24 : f32 to vector<16x256xf32>
    %71 = arith.cmpf ogt, %69, %70 : vector<16x256xf32>
    %72 = math.exp %69 : vector<16x256xf32>
    %cst_25 = arith.constant 1.000000e+00 : f32
    %73 = vector.broadcast %cst_25 : f32 to vector<16x256xf32>
    %74 = arith.subf %72, %73 : vector<16x256xf32>
    %75 = arith.select %71, %69, %74 : vector<16x256xi1>, vector<16x256xf32>
    %c0_26 = arith.constant 0 : index
    %c0_27 = arith.constant 0 : index
    %76 = vector.load %arg7[%c0_26, %c0_27] : memref<256x128xf32, #tpu.memory_space<vmem>>, vector<256x128xf32>
    %cst_28 = arith.constant dense<0.000000e+00> : vector<16x128xf32>
    %77 = tpu.matmul %75, %76, %cst_28 {dimension_numbers = #tpu.dot_dimension_numbers<[1], [0], [0], [1], [0, 0, 1, 1], [], []>} : vector<16x256xf32>, vector<256x128xf32>, vector<16x128xf32> -> vector<16x128xf32>
    %c0_29 = arith.constant 0 : index
    %c0_30 = arith.constant 0 : index
    %78 = vector.load %arg8[%c0_29, %c0_30] : memref<128x16xf32, #tpu.memory_space<vmem>>, vector<128x16xf32>
    %cst_31 = arith.constant dense<0.000000e+00> : vector<16x16xf32>
    %79 = tpu.matmul %77, %78, %cst_31 {dimension_numbers = #tpu.dot_dimension_numbers<[1], [0], [0], [1], [0, 0, 1, 1], [], []>} : vector<16x128xf32>, vector<128x16xf32>, vector<16x16xf32> -> vector<16x16xf32>
    %80 = vector.extract_strided_slice %79 {offsets = [0, 0], sizes = [16, 8], strides = [1, 1]} : vector<16x16xf32> to vector<16x8xf32>
    %81 = vector.extract_strided_slice %79 {offsets = [0, 8], sizes = [16, 8], strides = [1, 1]} : vector<16x16xf32> to vector<16x8xf32>
    %82 = tpu.concatenate %80, %81 in 0 : vector<16x8xf32>, vector<16x8xf32> -> vector<32x8xf32>
    %cst_32 = arith.constant dense<0.000000e+00> : vector<48x8xf32>
    %83 = tpu.matmul %21, %82, %cst_32 {dimension_numbers = #tpu.dot_dimension_numbers<[1], [0], [0], [1], [0, 0, 1, 1], [], []>} : vector<48x32xf32>, vector<32x8xf32>, vector<48x8xf32> -> vector<48x8xf32>
    %cst_33 = arith.constant 0.000000e+00 : f32
    %84 = vector.broadcast %cst_33 : f32 to vector<48x8xf32>
    %85 = arith.cmpf ogt, %83, %84 : vector<48x8xf32>
    %cst_34 = arith.constant 2.000000e-01 : f32
    %86 = vector.broadcast %cst_34 : f32 to vector<48x8xf32>
    %87 = arith.mulf %86, %83 : vector<48x8xf32>
    %88 = arith.select %85, %83, %87 : vector<48x8xi1>, vector<48x8xf32>
    %cst_35 = arith.constant dense<0xFF800000> : vector<8xf32>
    %89 = vector.multi_reduction <maximumf>, %88, %cst_35 [0] : vector<48x8xf32> to vector<8xf32>
    %90 = vector.shape_cast %89 : vector<8xf32> to vector<1x8xf32>
    %91 = vector.broadcast %90 : vector<1x8xf32> to vector<48x8xf32>
    %92 = arith.subf %88, %91 : vector<48x8xf32>
    %93 = math.exp %92 : vector<48x8xf32>
    %cst_36 = arith.constant dense<0.000000e+00> : vector<16x8xf32>
    %94 = tpu.matmul %26, %93, %cst_36 {dimension_numbers = #tpu.dot_dimension_numbers<[1], [0], [0], [1], [0, 0, 1, 1], [], []>} : vector<16x48xf32>, vector<48x8xf32>, vector<16x8xf32> -> vector<16x8xf32>
    %cst_37 = arith.constant dense<0.000000e+00> : vector<48x8xf32>
    %95 = tpu.matmul %11, %94, %cst_37 {dimension_numbers = #tpu.dot_dimension_numbers<[1], [0], [0], [1], [0, 0, 1, 1], [], []>} : vector<48x16xf32>, vector<16x8xf32>, vector<48x8xf32> -> vector<48x8xf32>
    %96 = tpu.reciprocal %95 {approx = true} : vector<48x8xf32> -> vector<48x8xf32>
    %97 = arith.mulf %93, %96 : vector<48x8xf32>
    %cst_38 = arith.constant dense<0.000000e+00> : vector<48x128xf32>
    %98 = tpu.matmul %7, %77, %cst_38 {dimension_numbers = #tpu.dot_dimension_numbers<[1], [0], [0], [1], [0, 0, 1, 1], [], []>} : vector<48x16xf32>, vector<16x128xf32>, vector<48x128xf32> -> vector<48x128xf32>
    %99 = tpu.iota {dimensions = array<i32: 1>} : vector<8x128xi32>
    %100 = tpu.iota {dimensions = array<i32: 0>} : vector<8x128xi32>
    %c16_i32_39 = arith.constant 16 : i32
    %101 = vector.broadcast %c16_i32_39 : i32 to vector<8x128xi32>
    %102 = arith.muli %100, %101 : vector<8x128xi32>
    %103 = arith.cmpi sge, %99, %102 : vector<8x128xi32>
    %c1_i32_40 = arith.constant 1 : i32
    %104 = vector.broadcast %c1_i32_40 : i32 to vector<8x128xi32>
    %105 = arith.addi %100, %104 : vector<8x128xi32>
    %c16_i32_41 = arith.constant 16 : i32
    %106 = vector.broadcast %c16_i32_41 : i32 to vector<8x128xi32>
    %107 = arith.muli %105, %106 : vector<8x128xi32>
    %108 = arith.cmpi slt, %99, %107 : vector<8x128xi32>
    %109 = arith.andi %103, %108 : vector<8x128xi1>
    %110 = arith.extui %109 : vector<8x128xi1> to vector<8x128xi32>
    %111 = arith.sitofp %110 : vector<8x128xi32> to vector<8x128xf32>
    %cst_42 = arith.constant dense<0.000000e+00> : vector<48x128xf32>
    %112 = tpu.matmul %97, %111, %cst_42 {dimension_numbers = #tpu.dot_dimension_numbers<[1], [0], [0], [1], [0, 0, 1, 1], [], []>} : vector<48x8xf32>, vector<8x128xf32>, vector<48x128xf32> -> vector<48x128xf32>
    %113 = arith.mulf %112, %98 : vector<48x128xf32>
    %cst_43 = arith.constant dense<0.000000e+00> : vector<16x128xf32>
    %114 = tpu.matmul %26, %113, %cst_43 {dimension_numbers = #tpu.dot_dimension_numbers<[1], [0], [0], [1], [0, 0, 1, 1], [], []>} : vector<16x48xf32>, vector<48x128xf32>, vector<16x128xf32> -> vector<16x128xf32>
    %c0_44 = arith.constant 0 : index
    %c0_45 = arith.constant 0 : index
    %115 = vector.load %arg9[%c0_44, %c0_45] : memref<1x128xf32, #tpu.memory_space<vmem>>, vector<1x128xf32>
    %116 = vector.broadcast %115 : vector<1x128xf32> to vector<16x128xf32>
    %117 = arith.addf %114, %116 : vector<16x128xf32>
    %c0_46 = arith.constant 0 : index
    %c0_47 = arith.constant 0 : index
    %118 = vector.load %arg10[%c0_46, %c0_47] : memref<16x128xf32, #tpu.memory_space<vmem>>, vector<16x128xf32>
    tpu.vector_store %arg10[%c0_46, %c0_47], %117 {strides = array<i32>} : memref<16x128xf32, #tpu.memory_space<vmem>>, vector<16x128xf32>,
    %c0_48 = arith.constant 0 : index
    %c0_49 = arith.constant 0 : index
    %119 = vector.load %arg11[%c0_48, %c0_49] : memref<48x8xf32, #tpu.memory_space<vmem>>, vector<48x8xf32>
    tpu.vector_store %arg11[%c0_48, %c0_49], %97 {strides = array<i32>} : memref<48x8xf32, #tpu.memory_space<vmem>>, vector<48x8xf32>,
    return
  }
}

</mosaic_0001>

<llo_original>
// kernel: tpu_custom_call.1
$region0: #{tpu_custom_call.1}
  #allocation0 [shape = 'u32[]', space=smem, size = 0x4, offset = 0x4, fixed_abs, tag = 'smem constant byte address 0x4 - core index']
  #allocation1 [shape = 'u32[144,128]{1,0:T(1,128)}', space=vmem, size = 0x12000, scoped, tag = 'internal scratch']
  %s0 = inlined_call_operand.vmem [shape: s32[48,1], index: 0, kind: input, shape index: {}]
  %s1 = inlined_call_operand.vmem [shape: s32[48,1], index: 1, kind: input, shape index: {}]
  %s2 = inlined_call_operand.hbm [shape: s32[1,48], index: 2, kind: input, shape index: {}]
  %s3 = inlined_call_operand.hbm [shape: f32[16,256], index: 3, kind: input, shape index: {}]
  %s4 = inlined_call_operand.vmem [shape: f32[256,256], index: 4, kind: input, shape index: {}]
  %s5 = inlined_call_operand.vmem [shape: f32[256,16], index: 5, kind: input, shape index: {}]
  %s6 = inlined_call_operand.hbm [shape: f32[1,256], index: 6, kind: input, shape index: {}]
  %s7 = inlined_call_operand.hbm [shape: f32[256,128], index: 7, kind: input, shape index: {}]
  %s8 = inlined_call_operand.vmem [shape: f32[128,16], index: 8, kind: input, shape index: {}]
  %s9 = inlined_call_operand.hbm [shape: f32[1,128], index: 9, kind: input, shape index: {}]
  %s10 = inlined_call_operand.hbm [shape: f32[16,128], index: 10, kind: output, shape index: {0}]
  %s11 = inlined_call_operand.vmem [shape: f32[48,8], index: 11, kind: output, shape index: {1}]
  %12 = xla_tuple %s10, %s11
  %s13 = sld [smem:[#allocation0]]
  $region78: #{tpu_custom_call.1} parent=0
    _
  %s15 = ssub.s32 1, %s13
  %s16 = scalar_select 0, %s15, %s13
  $region1: #{tpu_custom_call.1} parent=0
    #allocation2 [shape = 'u8[512]{0}', space=vmem, size = 0x400, scoped, tag = 'input window, operand 2, single buffered']
    #allocation3 [shape = 's32[1]{0}', space=sflag, size = 0x4, scoped, tag = 'scoped memory for tpu_custom_call.1']
    #allocation4 [shape = 's32[1]{0}', space=sflag, size = 0x4, scoped, tag = 'scoped memory for tpu_custom_call.1']
    #allocation5 [shape = 'u8[16384]{0}', space=vmem, size = 0x4000, scoped, tag = 'input window, operand 3, single buffered']
    #allocation6 [shape = 's32[1]{0}', space=sflag, size = 0x4, scoped, tag = 'scoped memory for tpu_custom_call.1']
    #allocation7 [shape = 'u8[1024]{0}', space=vmem, size = 0x400, scoped, tag = 'input window, operand 6, single buffered']
    #allocation8 [shape = 'u8[131072]{0}', space=vmem, size = 0x20000, scoped, tag = 'input window, operand 7, single buffered']
    #allocation9 [shape = 's32[1]{0}', space=sflag, size = 0x4, scoped, tag = 'scoped memory for tpu_custom_call.1']
    #allocation10 [shape = 'u8[512]{0}', space=vmem, size = 0x400, scoped, tag = 'input window, operand 9, single buffered']
    #allocation11 [shape = 'u8[8192]{0}', space=vmem, size = 0x2000, scoped, tag = 'output window, operand 0, single buffered']
    %17 = vsyncpa [#allocation3], 0
    %18 = vsyncpa [#allocation6], 0
    %19 = vsyncpa [#allocation9], 0
    %20 = vsyncpa [#allocation4], 0
    // Predicated region
    $region2: #{tpu_custom_call.1} parent=1 // pred_check
      _
    $region3: #{tpu_custom_call.1} parent=1 // pred_check_branch
      %22 = sbr.rel (0) target = $region5
    $region4: #{tpu_custom_call.1} parent=1 // pred_region
      _
    $region5: #{tpu_custom_call.1} parent=1 // pred_fallthru
      _
    // Predicated region
    $region6: #{tpu_custom_call.1} parent=1 // pred_check
      _
    $region7: #{tpu_custom_call.1} parent=1 // pred_check_branch
      %24 = sbr.rel (0) target = $region9
    $region8: #{tpu_custom_call.1} parent=1 // pred_region
      _
    $region9: #{tpu_custom_call.1} parent=1 // pred_fallthru
      _
    // Predicated region
    $region10: #{tpu_custom_call.1} parent=1 // pred_check
      _
    $region11: #{tpu_custom_call.1} parent=1 // pred_check_branch
      %26 = sbr.rel (0) target = $region13
    $region12: #{tpu_custom_call.1} parent=1 // pred_region
      %s28 = ssub.s32 16, 16
      %29 = vsyncadd [#allocation3], %s28
      %s31 = sshll.u32 [#allocation2], 4
      %s32 = int_to_ptr.vmem [resolvable:$true] %s31
      %34 = dma.hbm_to_vmem [thread:$0]  %s2, 16, %s32, [#allocation3]
    $region13: #{tpu_custom_call.1} parent=1 // pred_fallthru
      _
    // Predicated region
    $region14: #{tpu_custom_call.1} parent=1 // pred_check
      _
    $region15: #{tpu_custom_call.1} parent=1 // pred_check_branch
      %36 = sbr.rel (0) target = $region17
    $region16: #{tpu_custom_call.1} parent=1 // pred_region
      %s38 = ssub.s32 512, 512
      %39 = vsyncadd [#allocation6], %s38
      %s40 = sshll.u32 [#allocation5], 4
      %s41 = int_to_ptr.vmem [resolvable:$true] %s40
      %46 = dma.hbm_to_vmem [thread:$0]  %s3, 512, %s41, [#allocation6], 256, 256, 16
    $region17: #{tpu_custom_call.1} parent=1 // pred_fallthru
      _
    // Predicated region
    $region18: #{tpu_custom_call.1} parent=1 // pred_check
      _
    $region19: #{tpu_custom_call.1} parent=1 // pred_check_branch
      %48 = sbr.rel (0) target = $region21
    $region20: #{tpu_custom_call.1} parent=1 // pred_region
      _
    $region21: #{tpu_custom_call.1} parent=1 // pred_fallthru
      _
    // Predicated region
    $region22: #{tpu_custom_call.1} parent=1 // pred_check
      _
    $region23: #{tpu_custom_call.1} parent=1 // pred_check_branch
      %50 = sbr.rel (0) target = $region25
    $region24: #{tpu_custom_call.1} parent=1 // pred_region
      _
    $region25: #{tpu_custom_call.1} parent=1 // pred_fallthru
      _
    // Predicated region
    $region26: #{tpu_custom_call.1} parent=1 // pred_check
      _
    $region27: #{tpu_custom_call.1} parent=1 // pred_check_branch
      %52 = sbr.rel (0) target = $region29
    $region28: #{tpu_custom_call.1} parent=1 // pred_region
      %s54 = ssub.s32 32, 32
      %55 = vsyncadd [#allocation6], %s54
      %s57 = sshll.u32 [#allocation7], 4
      %s58 = int_to_ptr.vmem [resolvable:$true] %s57
      %60 = dma.hbm_to_vmem [thread:$0]  %s6, 32, %s58, [#allocation6]
    $region29: #{tpu_custom_call.1} parent=1 // pred_fallthru
      _
    // Predicated region
    $region30: #{tpu_custom_call.1} parent=1 // pred_check
      _
    $region31: #{tpu_custom_call.1} parent=1 // pred_check_branch
      %62 = sbr.rel (0) target = $region33
    $region32: #{tpu_custom_call.1} parent=1 // pred_region
      %s64 = ssub.s32 4096, 4096
      %65 = vsyncadd [#allocation9], %s64
      %s66 = sshll.u32 [#allocation8], 4
      %s67 = int_to_ptr.vmem [resolvable:$true] %s66
      %72 = dma.hbm_to_vmem [thread:$0]  %s7, 4096, %s67, [#allocation9], 128, 128, 8
    $region33: #{tpu_custom_call.1} parent=1 // pred_fallthru
      _
    // Predicated region
    $region34: #{tpu_custom_call.1} parent=1 // pred_check
      _
    $region35: #{tpu_custom_call.1} parent=1 // pred_check_branch
      %74 = sbr.rel (0) target = $region37
    $region36: #{tpu_custom_call.1} parent=1 // pred_region
      _
    $region37: #{tpu_custom_call.1} parent=1 // pred_fallthru
      _
    // Predicated region
    $region38: #{tpu_custom_call.1} parent=1 // pred_check
      _
    $region39: #{tpu_custom_call.1} parent=1 // pred_check_branch
      %76 = sbr.rel (0) target = $region41
    $region40: #{tpu_custom_call.1} parent=1 // pred_region
      %s78 = ssub.s32 16, 16
      %79 = vsyncadd [#allocation9], %s78
      %s81 = sshll.u32 [#allocation10], 4
      %s82 = int_to_ptr.vmem [resolvable:$true] %s81
      %84 = dma.hbm_to_vmem [thread:$0]  %s9, 16, %s82, [#allocation9]
    $region41: #{tpu_custom_call.1} parent=1 // pred_fallthru
      _
    // Predicated region
    $region42: #{tpu_custom_call.1} parent=1 // pred_check
      _
    $region43: #{tpu_custom_call.1} parent=1 // pred_check_branch
      %86 = sbr.rel (0) target = $region45
    $region44: #{tpu_custom_call.1} parent=1 // pred_region
      %87 = dma.done [#allocation3], 16
    $region45: #{tpu_custom_call.1} parent=1 // pred_fallthru
      _
    // Predicated region
    $region46: #{tpu_custom_call.1} parent=1 // pred_check
      _
    $region47: #{tpu_custom_call.1} parent=1 // pred_check_branch
      %89 = sbr.rel (0) target = $region49
    $region48: #{tpu_custom_call.1} parent=1 // pred_region
      %90 = dma.done [#allocation6], 512
    $region49: #{tpu_custom_call.1} parent=1 // pred_fallthru
      _
    // Predicated region
    $region50: #{tpu_custom_call.1} parent=1 // pred_check
      _
    $region51: #{tpu_custom_call.1} parent=1 // pred_check_branch
      %92 = sbr.rel (0) target = $region53
    $region52: #{tpu_custom_call.1} parent=1 // pred_region
      %93 = dma.done [#allocation6], 32
    $region53: #{tpu_custom_call.1} parent=1 // pred_fallthru
      _
    // Predicated region
    $region54: #{tpu_custom_call.1} parent=1 // pred_check
      _
    $region55: #{tpu_custom_call.1} parent=1 // pred_check_branch
      %95 = sbr.rel (0) target = $region57
    $region56: #{tpu_custom_call.1} parent=1 // pred_region
      %96 = dma.done [#allocation9], 4096
    $region57: #{tpu_custom_call.1} parent=1 // pred_fallthru
      _
    // Predicated region
    $region58: #{tpu_custom_call.1} parent=1 // pred_check
      _
    $region59: #{tpu_custom_call.1} parent=1 // pred_check_branch
      %98 = sbr.rel (0) target = $region61
    $region60: #{tpu_custom_call.1} parent=1 // pred_region
      %99 = dma.done [#allocation9], 16
    $region61: #{tpu_custom_call.1} parent=1 // pred_fallthru
      _
    %v100 = vld [vmem:[%s0] sm:$0xff]
    %v101 = vld [vmem:[%s0 + $0x8] sm:$0xff]
    %v102 = vld [vmem:[%s0 + $0x10] sm:$0xff]
    %v103 = vld [vmem:[%s0 + $0x18] sm:$0xff]
    %v104 = vld [vmem:[%s0 + $0x20] sm:$0xff]
    %v105 = vld [vmem:[%s0 + $0x28] sm:$0xff]
    %v106 = vld [vmem:[%s1] sm:$0xff]
    %v107 = vld [vmem:[%s1 + $0x8] sm:$0xff]
    %v108 = vld [vmem:[%s1 + $0x10] sm:$0xff]
    %v109 = vld [vmem:[%s1 + $0x18] sm:$0xff]
    %v110 = vld [vmem:[%s1 + $0x20] sm:$0xff]
    %v111 = vld [vmem:[%s1 + $0x28] sm:$0xff]
    %v112 = vld [vmem:[#allocation2] sm:$0x1]
    %v113 = vlaneseq
    %v114 = vand.u32 %v113, 127
    %115 = vset.pattern.permute.xlu0 0
    %116 = vperm.xlu0 %115, %v100
    %v117 = vpop.permute.xlu0 %116
    %118 = vset.pattern.permute.xlu0 0
    %119 = vperm.xlu0 %118, %v101
    %v120 = vpop.permute.xlu0 %119
    %121 = vset.pattern.permute.xlu0 0
    %122 = vperm.xlu0 %121, %v102
    %v123 = vpop.permute.xlu0 %122
    %124 = vset.pattern.permute.xlu0 0
    %125 = vperm.xlu0 %124, %v103
    %v126 = vpop.permute.xlu0 %125
    %127 = vset.pattern.permute.xlu0 0
    %128 = vperm.xlu0 %127, %v104
    %v129 = vpop.permute.xlu0 %128
    %130 = vset.pattern.permute.xlu0 0
    %131 = vperm.xlu0 %130, %v105
    %v132 = vpop.permute.xlu0 %131
    %vm133 = vcmp.eq.s32.totalorder %v114, %v117
    %vm134 = vcmp.eq.s32.totalorder %v114, %v120
    %vm135 = vcmp.eq.s32.totalorder %v114, %v123
    %vm136 = vcmp.eq.s32.totalorder %v114, %v126
    %vm137 = vcmp.eq.s32.totalorder %v114, %v129
    %vm138 = vcmp.eq.s32.totalorder %v114, %v132
    %v139 = vsel %vm133, 1, 0
    %v140 = vsel %vm134, 1, 0
    %v141 = vsel %vm135, 1, 0
    %v142 = vsel %vm136, 1, 0
    %v143 = vsel %vm137, 1, 0
    %v144 = vsel %vm138, 1, 0
    %v145 = vcvt.s32.f32 %v139
    %v146 = vcvt.s32.f32 %v140
    %v147 = vcvt.s32.f32 %v141
    %v148 = vcvt.s32.f32 %v142
    %v149 = vcvt.s32.f32 %v143
    %v150 = vcvt.s32.f32 %v144
    %151 = vset.pattern.permute.xlu0 0
    %152 = vperm.xlu0 %151, %v106
    %v153 = vpop.permute.xlu0 %152
    %154 = vset.pattern.permute.xlu0 0
    %155 = vperm.xlu0 %154, %v107
    %v156 = vpop.permute.xlu0 %155
    %157 = vset.pattern.permute.xlu0 0
    %158 = vperm.xlu0 %157, %v108
    %v159 = vpop.permute.xlu0 %158
    %160 = vset.pattern.permute.xlu0 0
    %161 = vperm.xlu0 %160, %v109
    %v162 = vpop.permute.xlu0 %161
    %163 = vset.pattern.permute.xlu0 0
    %164 = vperm.xlu0 %163, %v110
    %v165 = vpop.permute.xlu0 %164
    %166 = vset.pattern.permute.xlu0 0
    %167 = vperm.xlu0 %166, %v111
    %v168 = vpop.permute.xlu0 %167
    %vm169 = vcmp.eq.s32.totalorder %v114, %v153
    %vm170 = vcmp.eq.s32.totalorder %v114, %v156
    %vm171 = vcmp.eq.s32.totalorder %v114, %v159
    %vm172 = vcmp.eq.s32.totalorder %v114, %v162
    %vm173 = vcmp.eq.s32.totalorder %v114, %v165
    %vm174 = vcmp.eq.s32.totalorder %v114, %v168
    %v175 = vsel %vm169, 1, 0
    %v176 = vsel %vm170, 1, 0
    %v177 = vsel %vm171, 1, 0
    %v178 = vsel %vm172, 1, 0
    %v179 = vsel %vm173, 1, 0
    %v180 = vsel %vm174, 1, 0
    %v181 = vcvt.s32.f32 %v175
    %v182 = vcvt.s32.f32 %v176
    %v183 = vcvt.s32.f32 %v177
    %v184 = vcvt.s32.f32 %v178
    %v185 = vcvt.s32.f32 %v179
    %v186 = vcvt.s32.f32 %v180
    %v187 = vadd.s32 %v106, 16
    %v188 = vadd.s32 %v107, 16
    %v189 = vadd.s32 %v108, 16
    %v190 = vadd.s32 %v109, 16
    %v191 = vadd.s32 %v110, 16
    %v192 = vadd.s32 %v111, 16
    %193 = vset.pattern.permute.xlu0 0
    %194 = vperm.xlu0 %193, %v187
    %v195 = vpop.permute.xlu0 %194
    %196 = vset.pattern.permute.xlu0 0
    %197 = vperm.xlu0 %196, %v188
    %v198 = vpop.permute.xlu0 %197
    %199 = vset.pattern.permute.xlu0 0
    %200 = vperm.xlu0 %199, %v189
    %v201 = vpop.permute.xlu0 %200
    %202 = vset.pattern.permute.xlu0 0
    %203 = vperm.xlu0 %202, %v190
    %v204 = vpop.permute.xlu0 %203
    %205 = vset.pattern.permute.xlu0 0
    %206 = vperm.xlu0 %205, %v191
    %v207 = vpop.permute.xlu0 %206
    %208 = vset.pattern.permute.xlu0 0
    %209 = vperm.xlu0 %208, %v192
    %v210 = vpop.permute.xlu0 %209
    %vm211 = vcmp.eq.s32.totalorder %v114, %v195
    %vm212 = vcmp.eq.s32.totalorder %v114, %v198
    %vm213 = vcmp.eq.s32.totalorder %v114, %v201
    %vm214 = vcmp.eq.s32.totalorder %v114, %v204
    %vm215 = vcmp.eq.s32.totalorder %v114, %v207
    %vm216 = vcmp.eq.s32.totalorder %v114, %v210
    %vm217 = vmor %vm133, %vm211
    %vm218 = vmor %vm134, %vm212
    %vm219 = vmor %vm135, %vm213
    %vm220 = vmor %vm136, %vm214
    %vm221 = vmor %vm137, %vm215
    %vm222 = vmor %vm138, %vm216
    %v223 = vsel %vm217, 1, 0
    %v224 = vsel %vm218, 1, 0
    %v225 = vsel %vm219, 1, 0
    %v226 = vsel %vm220, 1, 0
    %v227 = vsel %vm221, 1, 0
    %v228 = vsel %vm222, 1, 0
    %v229 = vcvt.s32.f32 %v223
    %v230 = vcvt.s32.f32 %v224
    %v231 = vcvt.s32.f32 %v225
    %v232 = vcvt.s32.f32 %v226
    %v233 = vcvt.s32.f32 %v227
    %v234 = vcvt.s32.f32 %v228
    %v235 = vlaneseq
    %v236 = vshrl.u32 %v235, 7
    %v237 = vadd.s32 %v236, 8
    %v238 = vlaneseq
    %v239 = vshrl.u32 %v238, 7
    %v240 = vsub.s32 0, %v239
    %v241 = vrot.slane %v112, %v240
    %vm242 = vcmp.eq.s32.totalorder %v236, %v241
    %vm243 = vcmp.eq.s32.totalorder %v237, %v241
    %v244 = vsel %vm242, 1, 0
    %v245 = vsel %vm243, 1, 0
    %v246 = vcvt.s32.f32 %v244
    %v247 = vcvt.s32.f32 %v245
    %v248 = vld [vmem:[#allocation5] sm:$0xff]
    %v249 = vld [vmem:[#allocation5 + $0x8] sm:$0xff]
    %v250 = vld [vmem:[#allocation5 + $0x10] sm:$0xff]
    %v251 = vld [vmem:[#allocation5 + $0x18] sm:$0xff]
    %v252 = vld [vmem:[%s4] sm:$0xff]
    %v253 = vld [vmem:[%s4 + $0x8] sm:$0xff]
    %v254 = vld [vmem:[%s4 + $0x10] sm:$0xff]
    %v255 = vld [vmem:[%s4 + $0x18] sm:$0xff]
    %v256 = vld [vmem:[%s4 + $0x20] sm:$0xff]
    %v257 = vld [vmem:[%s4 + $0x28] sm:$0xff]
    %v258 = vld [vmem:[%s4 + $0x30] sm:$0xff]
    %v259 = vld [vmem:[%s4 + $0x38] sm:$0xff]
    %v260 = vld [vmem:[%s4 + $0x40] sm:$0xff]
    %v261 = vld [vmem:[%s4 + $0x48] sm:$0xff]
    %v262 = vld [vmem:[%s4 + $0x50] sm:$0xff]
    %v263 = vld [vmem:[%s4 + $0x58] sm:$0xff]
    %v264 = vld [vmem:[%s4 + $0x60] sm:$0xff]
    %v265 = vld [vmem:[%s4 + $0x68] sm:$0xff]
    %v266 = vld [vmem:[%s4 + $0x70] sm:$0xff]
    %v267 = vld [vmem:[%s4 + $0x78] sm:$0xff]
    %v268 = vld [vmem:[%s4 + $0x80] sm:$0xff]
    %v269 = vld [vmem:[%s4 + $0x88] sm:$0xff]
    %v270 = vld [vmem:[%s4 + $0x90] sm:$0xff]
    %v271 = vld [vmem:[%s4 + $0x98] sm:$0xff]
    %v272 = vld [vmem:[%s4 + $0xa0] sm:$0xff]
    %v273 = vld [vmem:[%s4 + $0xa8] sm:$0xff]
    %v274 = vld [vmem:[%s4 + $0xb0] sm:$0xff]
    %v275 = vld [vmem:[%s4 + $0xb8] sm:$0xff]
    %v276 = vld [vmem:[%s4 + $0xc0] sm:$0xff]
    %v277 = vld [vmem:[%s4 + $0xc8] sm:$0xff]
    %v278 = vld [vmem:[%s4 + $0xd0] sm:$0xff]
    %v279 = vld [vmem:[%s4 + $0xd8] sm:$0xff]
    %v280 = vld [vmem:[%s4 + $0xe0] sm:$0xff]
    %v281 = vld [vmem:[%s4 + $0xe8] sm:$0xff]
    %v282 = vld [vmem:[%s4 + $0xf0] sm:$0xff]
    %v283 = vld [vmem:[%s4 + $0xf8] sm:$0xff]
    %v284 = vld [vmem:[%s4 + $0x100] sm:$0xff]
    %v285 = vld [vmem:[%s4 + $0x108] sm:$0xff]
    %v286 = vld [vmem:[%s4 + $0x110] sm:$0xff]
    %v287 = vld [vmem:[%s4 + $0x118] sm:$0xff]
    %v288 = vld [vmem:[%s4 + $0x120] sm:$0xff]
    %v289 = vld [vmem:[%s4 + $0x128] sm:$0xff]
    %v290 = vld [vmem:[%s4 + $0x130] sm:$0xff]
    %v291 = vld [vmem:[%s4 + $0x138] sm:$0xff]
    %v292 = vld [vmem:[%s4 + $0x140] sm:$0xff]
    %v293 = vld [vmem:[%s4 + $0x148] sm:$0xff]
    %v294 = vld [vmem:[%s4 + $0x150] sm:$0xff]
    %v295 = vld [vmem:[%s4 + $0x158] sm:$0xff]
    %v296 = vld [vmem:[%s4 + $0x160] sm:$0xff]
    %v297 = vld [vmem:[%s4 + $0x168] sm:$0xff]
    %v298 = vld [vmem:[%s4 + $0x170] sm:$0xff]
    %v299 = vld [vmem:[%s4 + $0x178] sm:$0xff]
    %v300 = vld [vmem:[%s4 + $0x180] sm:$0xff]
    %v301 = vld [vmem:[%s4 + $0x188] sm:$0xff]
    %v302 = vld [vmem:[%s4 + $0x190] sm:$0xff]
    %v303 = vld [vmem:[%s4 + $0x198] sm:$0xff]
    %v304 = vld [vmem:[%s4 + $0x1a0] sm:$0xff]
    %v305 = vld [vmem:[%s4 + $0x1a8] sm:$0xff]
    %v306 = vld [vmem:[%s4 + $0x1b0] sm:$0xff]
    %v307 = vld [vmem:[%s4 + $0x1b8] sm:$0xff]
    %v308 = vld [vmem:[%s4 + $0x1c0] sm:$0xff]
    %v309 = vld [vmem:[%s4 + $0x1c8] sm:$0xff]
    %v310 = vld [vmem:[%s4 + $0x1d0] sm:$0xff]
    %v311 = vld [vmem:[%s4 + $0x1d8] sm:$0xff]
    %v312 = vld [vmem:[%s4 + $0x1e0] sm:$0xff]
    %v313 = vld [vmem:[%s4 + $0x1e8] sm:$0xff]
    %v314 = vld [vmem:[%s4 + $0x1f0] sm:$0xff]
    %v315 = vld [vmem:[%s4 + $0x1f8] sm:$0xff]
    %316 = vmatprep.subr.mxu0 %v253
    %317 = vmatpush1.msra.mxu0 %v252
    %318 = vmatprep.subr.mxu0 %v255
    %319 = vmatpush1.msra.mxu0 %v254
    %320 = vmatprep.subr.mxu0 %v257
    %321 = vmatpush1.msra.mxu0 %v256
    %322 = vmatprep.subr.mxu0 %v259
    %323 = vmatpush1.msra.mxu0 %v258
    %324 = vmatprep.subr.mxu0 %v261
    %325 = vmatpush1.msra.mxu0 %v260
    %326 = vmatprep.subr.mxu0 %v263
    %327 = vmatpush1.msra.mxu0 %v262
    %328 = vmatprep.subr.mxu0 %v265
    %329 = vmatpush1.msra.mxu0 %v264
    %330 = vmatprep.subr.mxu0 %v267
    %331 = vmatpush1.msra.mxu0 %v266
    %332 = vmatprep.subr.mxu0 %v269
    %333 = vmatpush1.msra.mxu0 %v268
    %334 = vmatprep.subr.mxu0 %v271
    %335 = vmatpush1.msra.mxu0 %v270
    %336 = vmatprep.subr.mxu0 %v273
    %337 = vmatpush1.msra.mxu0 %v272
    %338 = vmatprep.subr.mxu0 %v275
    %339 = vmatpush1.msra.mxu0 %v274
    %340 = vmatprep.subr.mxu0 %v277
    %341 = vmatpush1.msra.mxu0 %v276
    %342 = vmatprep.subr.mxu0 %v279
    %343 = vmatpush1.msra.mxu0 %v278
    %344 = vmatprep.subr.mxu0 %v281
    %345 = vmatpush1.msra.mxu0 %v280
    %346 = vmatprep.subr.mxu0 %v283
    %347 = vmatpush1.msra.mxu0 %v282
    %348 = vmatprep.subr.mxu0 %v285
    %349 = vmatpush1.msra.mxu0 %v284
    %350 = vmatprep.subr.mxu0 %v287
    %351 = vmatpush1.msra.mxu0 %v286
    %352 = vmatprep.subr.mxu0 %v289
    %353 = vmatpush1.msra.mxu0 %v288
    %354 = vmatprep.subr.mxu0 %v291
    %355 = vmatpush1.msra.mxu0 %v290
    %356 = vmatprep.subr.mxu0 %v293
    %357 = vmatpush1.msra.mxu0 %v292
    %358 = vmatprep.subr.mxu0 %v295
    %359 = vmatpush1.msra.mxu0 %v294
    %360 = vmatprep.subr.mxu0 %v297
    %361 = vmatpush1.msra.mxu0 %v296
    %362 = vmatprep.subr.mxu0 %v299
    %363 = vmatpush1.msra.mxu0 %v298
    %364 = vmatprep.subr.mxu0 %v301
    %365 = vmatpush1.msra.mxu0 %v300
    %366 = vmatprep.subr.mxu0 %v303
    %367 = vmatpush1.msra.mxu0 %v302
    %368 = vmatprep.subr.mxu0 %v305
    %369 = vmatpush1.msra.mxu0 %v304
    %370 = vmatprep.subr.mxu0 %v307
    %371 = vmatpush1.msra.mxu0 %v306
    %372 = vmatprep.subr.mxu0 %v309
    %373 = vmatpush1.msra.mxu0 %v308
    %374 = vmatprep.subr.mxu0 %v311
    %375 = vmatpush1.msra.mxu0 %v310
    %376 = vmatprep.subr.mxu0 %v313
    %377 = vmatpush1.msra.mxu0 %v312
    %378 = vmatprep.subr.mxu0 %v315
    %379 = vmatpush1.msra.mxu0 %v314
    %380 = vmatprep.mubr.f32.mxu0 %v249
    %381 = vmatmul.mubr.f32.gmra.mrb[0].mxu0 %v248
    %v382 = vpop.f32.mrb[0].mxu0
    %v383 = vadd.f32 0.0, %v382
    %v384 = vpop.f32.mrb[0].mxu0
    %v385 = vadd.f32 0.0, %v384
    %386 = vmatprep.mubr.f32.mxu0 %v251
    %387 = vmatmul.mubr.f32.gmra.mrb[0].mxu0 %v250
    %v388 = vpop.f32.mrb[0].mxu0
    %v389 = vadd.f32 0.0, %v388
    %v390 = vpop.f32.mrb[0].mxu0
    %v391 = vadd.f32 0.0, %v390
    %392 = vdwg.mxu0
    %v393 = vld [vmem:[%s5] sm:$0xff]
    %v394 = vld [vmem:[%s5 + $0x8] sm:$0xff]
    %v395 = vld [vmem:[%s5 + $0x10] sm:$0xff]
    %v396 = vld [vmem:[%s5 + $0x18] sm:$0xff]
    %v397 = vld [vmem:[%s5 + $0x20] sm:$0xff]
    %v398 = vld [vmem:[%s5 + $0x28] sm:$0xff]
    %v399 = vld [vmem:[%s5 + $0x30] sm:$0xff]
    %v400 = vld [vmem:[%s5 + $0x38] sm:$0xff]
    %v401 = vld [vmem:[%s5 + $0x40] sm:$0xff]
    %v402 = vld [vmem:[%s5 + $0x48] sm:$0xff]
    %v403 = vld [vmem:[%s5 + $0x50] sm:$0xff]
    %v404 = vld [vmem:[%s5 + $0x58] sm:$0xff]
    %v405 = vld [vmem:[%s5 + $0x60] sm:$0xff]
    %v406 = vld [vmem:[%s5 + $0x68] sm:$0xff]
    %v407 = vld [vmem:[%s5 + $0x70] sm:$0xff]
    %v408 = vld [vmem:[%s5 + $0x78] sm:$0xff]
    %v409 = vld [vmem:[%s5 + $0x80] sm:$0xff]
    %v410 = vld [vmem:[%s5 + $0x88] sm:$0xff]
    %v411 = vld [vmem:[%s5 + $0x90] sm:$0xff]
    %v412 = vld [vmem:[%s5 + $0x98] sm:$0xff]
    %v413 = vld [vmem:[%s5 + $0xa0] sm:$0xff]
    %v414 = vld [vmem:[%s5 + $0xa8] sm:$0xff]
    %v415 = vld [vmem:[%s5 + $0xb0] sm:$0xff]
    %v416 = vld [vmem:[%s5 + $0xb8] sm:$0xff]
    %v417 = vld [vmem:[%s5 + $0xc0] sm:$0xff]
    %v418 = vld [vmem:[%s5 + $0xc8] sm:$0xff]
    %v419 = vld [vmem:[%s5 + $0xd0] sm:$0xff]
    %v420 = vld [vmem:[%s5 + $0xd8] sm:$0xff]
    %v421 = vld [vmem:[%s5 + $0xe0] sm:$0xff]
    %v422 = vld [vmem:[%s5 + $0xe8] sm:$0xff]
    %v423 = vld [vmem:[%s5 + $0xf0] sm:$0xff]
    %v424 = vld [vmem:[%s5 + $0xf8] sm:$0xff]
    %425 = vmatprep.subr.mxu0 0.0
    %426 = vmatpush1.msra.mxu0 %v393
    %427 = vmatprep.subr.mxu0 0.0
    %428 = vmatpush1.msra.mxu0 %v394
    %429 = vmatprep.subr.mxu0 0.0
    %430 = vmatpush1.msra.mxu0 %v395
    %431 = vmatprep.subr.mxu0 0.0
    %432 = vmatpush1.msra.mxu0 %v396
    %433 = vmatprep.subr.mxu0 0.0
    %434 = vmatpush1.msra.mxu0 %v397
    %435 = vmatprep.subr.mxu0 0.0
    %436 = vmatpush1.msra.mxu0 %v398
    %437 = vmatprep.subr.mxu0 0.0
    %438 = vmatpush1.msra.mxu0 %v399
    %439 = vmatprep.subr.mxu0 0.0
    %440 = vmatpush1.msra.mxu0 %v400
    %441 = vmatprep.subr.mxu0 0.0
    %442 = vmatpush1.msra.mxu0 %v401
    %443 = vmatprep.subr.mxu0 0.0
    %444 = vmatpush1.msra.mxu0 %v402
    %445 = vmatprep.subr.mxu0 0.0
    %446 = vmatpush1.msra.mxu0 %v403
    %447 = vmatprep.subr.mxu0 0.0
    %448 = vmatpush1.msra.mxu0 %v404
    %449 = vmatprep.subr.mxu0 0.0
    %450 = vmatpush1.msra.mxu0 %v405
    %451 = vmatprep.subr.mxu0 0.0
    %452 = vmatpush1.msra.mxu0 %v406
    %453 = vmatprep.subr.mxu0 0.0
    %454 = vmatpush1.msra.mxu0 %v407
    %455 = vmatprep.subr.mxu0 0.0
    %456 = vmatpush1.msra.mxu0 %v408
    %457 = vmatprep.subr.mxu0 0.0
    %458 = vmatpush1.msra.mxu0 %v409
    %459 = vmatprep.subr.mxu0 0.0
    %460 = vmatpush1.msra.mxu0 %v410
    %461 = vmatprep.subr.mxu0 0.0
    %462 = vmatpush1.msra.mxu0 %v411
    %463 = vmatprep.subr.mxu0 0.0
    %464 = vmatpush1.msra.mxu0 %v412
    %465 = vmatprep.subr.mxu0 0.0
    %466 = vmatpush1.msra.mxu0 %v413
    %467 = vmatprep.subr.mxu0 0.0
    %468 = vmatpush1.msra.mxu0 %v414
    %469 = vmatprep.subr.mxu0 0.0
    %470 = vmatpush1.msra.mxu0 %v415
    %471 = vmatprep.subr.mxu0 0.0
    %472 = vmatpush1.msra.mxu0 %v416
    %473 = vmatprep.subr.mxu0 0.0
    %474 = vmatpush1.msra.mxu0 %v417
    %475 = vmatprep.subr.mxu0 0.0
    %476 = vmatpush1.msra.mxu0 %v418
    %477 = vmatprep.subr.mxu0 0.0
    %478 = vmatpush1.msra.mxu0 %v419
    %479 = vmatprep.subr.mxu0 0.0
    %480 = vmatpush1.msra.mxu0 %v420
    %481 = vmatprep.subr.mxu0 0.0
    %482 = vmatpush1.msra.mxu0 %v421
    %483 = vmatprep.subr.mxu0 0.0
    %484 = vmatpush1.msra.mxu0 %v422
    %485 = vmatprep.subr.mxu0 0.0
    %486 = vmatpush1.msra.mxu0 %v423
    %487 = vmatprep.subr.mxu0 0.0
    %488 = vmatpush1.msra.mxu0 %v424
    %489 = vmatprep.mubr.f32.mxu0 %v385
    %490 = vmatmul.mubr.f32.gmra.mrb[0].mxu0 %v383
    %v491 = vpop.f32.mrb[0].mxu0
    %v492 = vadd.f32 0.0, %v491
    %v493 = vpop.f32.mrb[0].mxu0
    %494 = vmatprep.mubr.f32.mxu0 %v391
    %495 = vmatmul.mubr.f32.gmra.mrb[0].mxu0 %v389
    %v496 = vpop.f32.mrb[0].mxu0
    %v497 = vadd.f32 0.0, %v496
    %v498 = vpop.f32.mrb[0].mxu0
    %499 = vdwg.mxu0
    %502 = vrot.lane.b32.xlu0 %v492, 120
    %v503 = vpop.permute.xlu0 %502
    %504 = vrot.lane.b32.xlu0 %v497, 120
    %v505 = vpop.permute.xlu0 %504
    %vm508 = vcmask 261120
    %v510 = vsel %vm508, %v229, 0
    %v513 = vsel %vm508, %v230, 0
    %v516 = vsel %vm508, %v231, 0
    %v519 = vsel %vm508, %v232, 0
    %v522 = vsel %vm508, %v233, 0
    %v525 = vsel %vm508, %v234, 0
    %527 = vmatprep.subr.mxu0 0.0
    %528 = vmatpush1.msra.mxu0 %v492
    %529 = vmatprep.subr.mxu0 0.0
    %530 = vmatpush1.msra.mxu0 %v497
    %531 = vmatprep.subr.mxu0 0.0
    %532 = vmatpush1.msra.mxu0 %v503
    %533 = vmatprep.subr.mxu0 0.0
    %534 = vmatpush1.msra.mxu0 %v505
    %535 = vmatprep.subr.mxu0 0.0
    %536 = vmatpush1.msra.mxu0 0.0
    %537 = vmatprep.subr.mxu0 0.0
    %538 = vmatpush1.msra.mxu0 0.0
    %539 = vmatprep.subr.mxu0 0.0
    %540 = vmatpush1.msra.mxu0 0.0
    %541 = vmatprep.subr.mxu0 0.0
    %542 = vmatpush1.msra.mxu0 0.0
    %543 = vmatprep.subr.mxu0 0.0
    %544 = vmatpush1.msra.mxu0 0.0
    %545 = vmatprep.subr.mxu0 0.0
    %546 = vmatpush1.msra.mxu0 0.0
    %547 = vmatprep.subr.mxu0 0.0
    %548 = vmatpush1.msra.mxu0 0.0
    %549 = vmatprep.subr.mxu0 0.0
    %550 = vmatpush1.msra.mxu0 0.0
    %551 = vmatprep.subr.mxu0 0.0
    %552 = vmatpush1.msra.mxu0 0.0
    %553 = vmatprep.subr.mxu0 0.0
    %554 = vmatpush1.msra.mxu0 0.0
    %555 = vmatprep.subr.mxu0 0.0
    %556 = vmatpush1.msra.mxu0 0.0
    %557 = vmatprep.subr.mxu0 0.0
    %558 = vmatpush1.msra.mxu0 0.0
    %559 = vmatprep.subr.mxu0 0.0
    %560 = vmatpush1.msra.mxu0 0.0
    %561 = vmatprep.subr.mxu0 0.0
    %562 = vmatpush1.msra.mxu0 0.0
    %563 = vmatprep.subr.mxu0 0.0
    %564 = vmatpush1.msra.mxu0 0.0
    %565 = vmatprep.subr.mxu0 0.0
    %566 = vmatpush1.msra.mxu0 0.0
    %567 = vmatprep.subr.mxu0 0.0
    %568 = vmatpush1.msra.mxu0 0.0
    %569 = vmatprep.subr.mxu0 0.0
    %570 = vmatpush1.msra.mxu0 0.0
    %571 = vmatprep.subr.mxu0 0.0
    %572 = vmatpush1.msra.mxu0 0.0
    %573 = vmatprep.subr.mxu0 0.0
    %574 = vmatpush1.msra.mxu0 0.0
    %575 = vmatprep.subr.mxu0 0.0
    %576 = vmatpush1.msra.mxu0 0.0
    %577 = vmatprep.subr.mxu0 0.0
    %578 = vmatpush1.msra.mxu0 0.0
    %579 = vmatprep.subr.mxu0 0.0
    %580 = vmatpush1.msra.mxu0 0.0
    %581 = vmatprep.subr.mxu0 0.0
    %582 = vmatpush1.msra.mxu0 0.0
    %583 = vmatprep.subr.mxu0 0.0
    %584 = vmatpush1.msra.mxu0 0.0
    %585 = vmatprep.subr.mxu0 0.0
    %586 = vmatpush1.msra.mxu0 0.0
    %587 = vmatprep.subr.mxu0 0.0
    %588 = vmatpush1.msra.mxu0 0.0
    %589 = vmatprep.subr.mxu0 0.0
    %590 = vmatpush1.msra.mxu0 0.0
    %591 = vmatprep.mubr.f32.mxu0 0.0
    %592 = vmatmul.mubr.f32.gmra.mrb[0].mxu0 %v510
    %v593 = vpop.f32.mrb[0].mxu0
    %v594 = vadd.f32 0.0, %v593
    %v595 = vpop.f32.mrb[0].mxu0
    %596 = vmatprep.mubr.f32.mxu0 0.0
    %597 = vmatmul.mubr.f32.gmra.mrb[0].mxu0 %v513
    %v598 = vpop.f32.mrb[0].mxu0
    %v599 = vadd.f32 0.0, %v598
    %v600 = vpop.f32.mrb[0].mxu0
    %601 = vmatprep.mubr.f32.mxu0 0.0
    %602 = vmatmul.mubr.f32.gmra.mrb[0].mxu0 %v516
    %v603 = vpop.f32.mrb[0].mxu0
    %v604 = vadd.f32 0.0, %v603
    %v605 = vpop.f32.mrb[0].mxu0
    %606 = vmatprep.mubr.f32.mxu0 0.0
    %607 = vmatmul.mubr.f32.gmra.mrb[0].mxu0 %v519
    %v608 = vpop.f32.mrb[0].mxu0
    %v609 = vadd.f32 0.0, %v608
    %v610 = vpop.f32.mrb[0].mxu0
    %611 = vmatprep.mubr.f32.mxu0 0.0
    %612 = vmatmul.mubr.f32.gmra.mrb[0].mxu0 %v522
    %v613 = vpop.f32.mrb[0].mxu0
    %v614 = vadd.f32 0.0, %v613
    %v615 = vpop.f32.mrb[0].mxu0
    %616 = vmatprep.mubr.f32.mxu0 0.0
    %617 = vmatmul.mubr.f32.gmra.mrb[0].mxu0 %v525
    %v618 = vpop.f32.mrb[0].mxu0
    %v619 = vadd.f32 0.0, %v618
    %v620 = vpop.f32.mrb[0].mxu0
    %621 = vdwg.mxu0
    %vm622 = vcmp.gt.f32.partialorder %v594, 0.0
    %vm623 = vcmp.gt.f32.partialorder %v599, 0.0
    %vm624 = vcmp.gt.f32.partialorder %v604, 0.0
    %vm625 = vcmp.gt.f32.partialorder %v609, 0.0
    %vm626 = vcmp.gt.f32.partialorder %v614, 0.0
    %vm627 = vcmp.gt.f32.partialorder %v619, 0.0
    %v628 = vmul.f32 %v594, 0.2
    %v629 = vmul.f32 %v599, 0.2
    %v630 = vmul.f32 %v604, 0.2
    %v631 = vmul.f32 %v609, 0.2
    %v632 = vmul.f32 %v614, 0.2
    %v633 = vmul.f32 %v619, 0.2
    %v634 = vsel %vm622, %v594, %v628
    %v635 = vsel %vm623, %v599, %v629
    %v636 = vsel %vm624, %v604, %v630
    %v637 = vsel %vm625, %v609, %v631
    %v638 = vsel %vm626, %v614, %v632
    %v639 = vsel %vm627, %v619, %v633
    %vm640 = vcmask 64512
    %v641 = vsel %vm640, %v634, -inf
    %v642 = vsel %vm640, %v635, -inf
    %v643 = vsel %vm640, %v636, -inf
    %v644 = vsel %vm640, %v637, -inf
    %v645 = vsel %vm640, %v638, -inf
    %v646 = vmax.f32 %v641, %v645
    %v647 = vsel %vm640, %v639, -inf
    %v648 = vmax.f32 %v642, %v647
    %v649 = vmax.f32 %v646, %v648
    %v650 = vmax.f32 %v643, %v644
    %v651 = vmax.f32 %v649, %v650
    %v652 = vrot.slane %v651, 4
    %v653 = vmax.f32 %v651, %v652
    %v654 = vrot.slane %v653, 2
    %v655 = vmax.f32 %v653, %v654
    %v656 = vrot.slane %v655, 1
    %v657 = vmax.f32 %v655, %v656
    %v658 = vsub.f32 %v634, %v657
    %v659 = vsub.f32 %v635, %v657
    %v660 = vsub.f32 %v636, %v657
    %v661 = vsub.f32 %v637, %v657
    %v662 = vsub.f32 %v638, %v657
    %v663 = vsub.f32 %v639, %v657
    %v664 = vmul.f32 %v658, 1.442695
    %v665 = vpow.pop %v664
    %v666 = vmul.f32 %v659, 1.442695
    %v667 = vpow.pop %v666
    %v668 = vmul.f32 %v660, 1.442695
    %v669 = vpow.pop %v668
    %v670 = vmul.f32 %v661, 1.442695
    %v671 = vpow.pop %v670
    %v672 = vmul.f32 %v662, 1.442695
    %v673 = vpow.pop %v672
    %v674 = vmul.f32 %v663, 1.442695
    %v675 = vpow.pop %v674
    %vm676 = vcmask 392192
    %v678 = vsel %vm676, %v246, 0
    %v681 = vsel %vm676, %v247, 0
    %683 = vmatprep.subr.mxu0 0.0
    %684 = vmatpush1.msra.mxu0 %v665
    %685 = vmatprep.subr.mxu0 0.0
    %686 = vmatpush1.msra.mxu0 %v667
    %687 = vmatprep.subr.mxu0 0.0
    %688 = vmatpush1.msra.mxu0 %v669
    %689 = vmatprep.subr.mxu0 0.0
    %690 = vmatpush1.msra.mxu0 %v671
    %691 = vmatprep.subr.mxu0 0.0
    %692 = vmatpush1.msra.mxu0 %v673
    %693 = vmatprep.subr.mxu0 0.0
    %694 = vmatpush1.msra.mxu0 %v675
    %695 = vmatprep.subr.mxu0 0.0
    %696 = vmatpush1.msra.mxu0 0.0
    %697 = vmatprep.subr.mxu0 0.0
    %698 = vmatpush1.msra.mxu0 0.0
    %699 = vmatprep.subr.mxu0 0.0
    %700 = vmatpush1.msra.mxu0 0.0
    %701 = vmatprep.subr.mxu0 0.0
    %702 = vmatpush1.msra.mxu0 0.0
    %703 = vmatprep.subr.mxu0 0.0
    %704 = vmatpush1.msra.mxu0 0.0
    %705 = vmatprep.subr.mxu0 0.0
    %706 = vmatpush1.msra.mxu0 0.0
    %707 = vmatprep.subr.mxu0 0.0
    %708 = vmatpush1.msra.mxu0 0.0
    %709 = vmatprep.subr.mxu0 0.0
    %710 = vmatpush1.msra.mxu0 0.0
    %711 = vmatprep.subr.mxu0 0.0
    %712 = vmatpush1.msra.mxu0 0.0
    %713 = vmatprep.subr.mxu0 0.0
    %714 = vmatpush1.msra.mxu0 0.0
    %715 = vmatprep.subr.mxu0 0.0
    %716 = vmatpush1.msra.mxu0 0.0
    %717 = vmatprep.subr.mxu0 0.0
    %718 = vmatpush1.msra.mxu0 0.0
    %719 = vmatprep.subr.mxu0 0.0
    %720 = vmatpush1.msra.mxu0 0.0
    %721 = vmatprep.subr.mxu0 0.0
    %722 = vmatpush1.msra.mxu0 0.0
    %723 = vmatprep.subr.mxu0 0.0
    %724 = vmatpush1.msra.mxu0 0.0
    %725 = vmatprep.subr.mxu0 0.0
    %726 = vmatpush1.msra.mxu0 0.0
    %727 = vmatprep.subr.mxu0 0.0
    %728 = vmatpush1.msra.mxu0 0.0
    %729 = vmatprep.subr.mxu0 0.0
    %730 = vmatpush1.msra.mxu0 0.0
    %731 = vmatprep.subr.mxu0 0.0
    %732 = vmatpush1.msra.mxu0 0.0
    %733 = vmatprep.subr.mxu0 0.0
    %734 = vmatpush1.msra.mxu0 0.0
    %735 = vmatprep.subr.mxu0 0.0
    %736 = vmatpush1.msra.mxu0 0.0
    %737 = vmatprep.subr.mxu0 0.0
    %738 = vmatpush1.msra.mxu0 0.0
    %739 = vmatprep.subr.mxu0 0.0
    %740 = vmatpush1.msra.mxu0 0.0
    %741 = vmatprep.subr.mxu0 0.0
    %742 = vmatpush1.msra.mxu0 0.0
    %743 = vmatprep.subr.mxu0 0.0
    %744 = vmatpush1.msra.mxu0 0.0
    %745 = vmatprep.subr.mxu0 0.0
    %746 = vmatpush1.msra.mxu0 0.0
    %747 = vmatprep.mubr.f32.mxu0 0.0
    %748 = vmatmul.mubr.f32.gmra.mrb[0].mxu0 %v678
    %v749 = vpop.f32.mrb[0].mxu0
    %v750 = vadd.f32 0.0, %v749
    %v751 = vpop.f32.mrb[0].mxu0
    %752 = vmatprep.mubr.f32.mxu0 0.0
    %753 = vmatmul.mubr.f32.gmra.mrb[0].mxu0 %v681
    %v754 = vpop.f32.mrb[0].mxu0
    %v755 = vadd.f32 0.0, %v754
    %v756 = vpop.f32.mrb[0].mxu0
    %757 = vdwg.mxu0
    %vm758 = vcmask 130048
    %v760 = vsel %vm758, %v181, 0
    %v763 = vsel %vm758, %v182, 0
    %v766 = vsel %vm758, %v183, 0
    %v769 = vsel %vm758, %v184, 0
    %v772 = vsel %vm758, %v185, 0
    %v775 = vsel %vm758, %v186, 0
    %777 = vmatprep.subr.mxu0 0.0
    %778 = vmatpush1.msra.mxu0 %v750
    %779 = vmatprep.subr.mxu0 0.0
    %780 = vmatpush1.msra.mxu0 %v755
    %781 = vmatprep.subr.mxu0 0.0
    %782 = vmatpush1.msra.mxu0 0.0
    %783 = vmatprep.subr.mxu0 0.0
    %784 = vmatpush1.msra.mxu0 0.0
    %785 = vmatprep.subr.mxu0 0.0
    %786 = vmatpush1.msra.mxu0 0.0
    %787 = vmatprep.subr.mxu0 0.0
    %788 = vmatpush1.msra.mxu0 0.0
    %789 = vmatprep.subr.mxu0 0.0
    %790 = vmatpush1.msra.mxu0 0.0
    %791 = vmatprep.subr.mxu0 0.0
    %792 = vmatpush1.msra.mxu0 0.0
    %793 = vmatprep.subr.mxu0 0.0
    %794 = vmatpush1.msra.mxu0 0.0
    %795 = vmatprep.subr.mxu0 0.0
    %796 = vmatpush1.msra.mxu0 0.0
    %797 = vmatprep.subr.mxu0 0.0
    %798 = vmatpush1.msra.mxu0 0.0
    %799 = vmatprep.subr.mxu0 0.0
    %800 = vmatpush1.msra.mxu0 0.0
    %801 = vmatprep.subr.mxu0 0.0
    %802 = vmatpush1.msra.mxu0 0.0
    %803 = vmatprep.subr.mxu0 0.0
    %804 = vmatpush1.msra.mxu0 0.0
    %805 = vmatprep.subr.mxu0 0.0
    %806 = vmatpush1.msra.mxu0 0.0
    %807 = vmatprep.subr.mxu0 0.0
    %808 = vmatpush1.msra.mxu0 0.0
    %809 = vmatprep.subr.mxu0 0.0
    %810 = vmatpush1.msra.mxu0 0.0
    %811 = vmatprep.subr.mxu0 0.0
    %812 = vmatpush1.msra.mxu0 0.0
    %813 = vmatprep.subr.mxu0 0.0
    %814 = vmatpush1.msra.mxu0 0.0
    %815 = vmatprep.subr.mxu0 0.0
    %816 = vmatpush1.msra.mxu0 0.0
    %817 = vmatprep.subr.mxu0 0.0
    %818 = vmatpush1.msra.mxu0 0.0
    %819 = vmatprep.subr.mxu0 0.0
    %820 = vmatpush1.msra.mxu0 0.0
    %821 = vmatprep.subr.mxu0 0.0
    %822 = vmatpush1.msra.mxu0 0.0
    %823 = vmatprep.subr.mxu0 0.0
    %824 = vmatpush1.msra.mxu0 0.0
    %825 = vmatprep.subr.mxu0 0.0
    %826 = vmatpush1.msra.mxu0 0.0
    %827 = vmatprep.subr.mxu0 0.0
    %828 = vmatpush1.msra.mxu0 0.0
    %829 = vmatprep.subr.mxu0 0.0
    %830 = vmatpush1.msra.mxu0 0.0
    %831 = vmatprep.subr.mxu0 0.0
    %832 = vmatpush1.msra.mxu0 0.0
    %833 = vmatprep.subr.mxu0 0.0
    %834 = vmatpush1.msra.mxu0 0.0
    %835 = vmatprep.subr.mxu0 0.0
    %836 = vmatpush1.msra.mxu0 0.0
    %837 = vmatprep.subr.mxu0 0.0
    %838 = vmatpush1.msra.mxu0 0.0
    %839 = vmatprep.subr.mxu0 0.0
    %840 = vmatpush1.msra.mxu0 0.0
    %841 = vmatprep.mubr.f32.mxu0 0.0
    %842 = vmatmul.mubr.f32.gmra.mrb[0].mxu0 %v760
    %v843 = vpop.f32.mrb[0].mxu0
    %v844 = vadd.f32 0.0, %v843
    %v845 = vpop.f32.mrb[0].mxu0
    %846 = vmatprep.mubr.f32.mxu0 0.0
    %847 = vmatmul.mubr.f32.gmra.mrb[0].mxu0 %v763
    %v848 = vpop.f32.mrb[0].mxu0
    %v849 = vadd.f32 0.0, %v848
    %v850 = vpop.f32.mrb[0].mxu0
    %851 = vmatprep.mubr.f32.mxu0 0.0
    %852 = vmatmul.mubr.f32.gmra.mrb[0].mxu0 %v766
    %v853 = vpop.f32.mrb[0].mxu0
    %v854 = vadd.f32 0.0, %v853
    %v855 = vpop.f32.mrb[0].mxu0
    %856 = vmatprep.mubr.f32.mxu0 0.0
    %857 = vmatmul.mubr.f32.gmra.mrb[0].mxu0 %v769
    %v858 = vpop.f32.mrb[0].mxu0
    %v859 = vadd.f32 0.0, %v858
    %v860 = vpop.f32.mrb[0].mxu0
    %861 = vmatprep.mubr.f32.mxu0 0.0
    %862 = vmatmul.mubr.f32.gmra.mrb[0].mxu0 %v772
    %v863 = vpop.f32.mrb[0].mxu0
    %v864 = vadd.f32 0.0, %v863
    %v865 = vpop.f32.mrb[0].mxu0
    %866 = vmatprep.mubr.f32.mxu0 0.0
    %867 = vmatmul.mubr.f32.gmra.mrb[0].mxu0 %v775
    %v868 = vpop.f32.mrb[0].mxu0
    %v869 = vadd.f32 0.0, %v868
    %v870 = vpop.f32.mrb[0].mxu0
    %871 = vdwg.mxu0
    %v872 = vrcp.pop %v844
    %v873 = vrcp.pop %v849
    %v874 = vrcp.pop %v854
    %v875 = vrcp.pop %v859
    %v876 = vrcp.pop %v864
    %v877 = vrcp.pop %v869
    %v878 = vmul.f32 %v665, %v872
    %v879 = vmul.f32 %v667, %v873
    %v880 = vmul.f32 %v669, %v874
    %v881 = vmul.f32 %v671, %v875
    %v882 = vmul.f32 %v673, %v876
    %v883 = vmul.f32 %v675, %v877
    %v885 = vsel %vm758, %v145, 0
    %v888 = vsel %vm758, %v146, 0
    %v891 = vsel %vm758, %v147, 0
    %v894 = vsel %vm758, %v148, 0
    %v897 = vsel %vm758, %v149, 0
    %v900 = vsel %vm758, %v150, 0
    %902 = vmatprep.subr.mxu0 %v385
    %903 = vmatpush1.msra.mxu0 %v383
    %904 = vmatprep.subr.mxu0 %v391
    %905 = vmatpush1.msra.mxu0 %v389
    %906 = vmatprep.subr.mxu0 0.0
    %907 = vmatpush1.msra.mxu0 0.0
    %908 = vmatprep.subr.mxu0 0.0
    %909 = vmatpush1.msra.mxu0 0.0
    %910 = vmatprep.subr.mxu0 0.0
    %911 = vmatpush1.msra.mxu0 0.0
    %912 = vmatprep.subr.mxu0 0.0
    %913 = vmatpush1.msra.mxu0 0.0
    %914 = vmatprep.subr.mxu0 0.0
    %915 = vmatpush1.msra.mxu0 0.0
    %916 = vmatprep.subr.mxu0 0.0
    %917 = vmatpush1.msra.mxu0 0.0
    %918 = vmatprep.subr.mxu0 0.0
    %919 = vmatpush1.msra.mxu0 0.0
    %920 = vmatprep.subr.mxu0 0.0
    %921 = vmatpush1.msra.mxu0 0.0
    %922 = vmatprep.subr.mxu0 0.0
    %923 = vmatpush1.msra.mxu0 0.0
    %924 = vmatprep.subr.mxu0 0.0
    %925 = vmatpush1.msra.mxu0 0.0
    %926 = vmatprep.subr.mxu0 0.0
    %927 = vmatpush1.msra.mxu0 0.0
    %928 = vmatprep.subr.mxu0 0.0
    %929 = vmatpush1.msra.mxu0 0.0
    %930 = vmatprep.subr.mxu0 0.0
    %931 = vmatpush1.msra.mxu0 0.0
    %932 = vmatprep.subr.mxu0 0.0
    %933 = vmatpush1.msra.mxu0 0.0
    %934 = vmatprep.subr.mxu0 0.0
    %935 = vmatpush1.msra.mxu0 0.0
    %936 = vmatprep.subr.mxu0 0.0
    %937 = vmatpush1.msra.mxu0 0.0
    %938 = vmatprep.subr.mxu0 0.0
    %939 = vmatpush1.msra.mxu0 0.0
    %940 = vmatprep.subr.mxu0 0.0
    %941 = vmatpush1.msra.mxu0 0.0
    %942 = vmatprep.subr.mxu0 0.0
    %943 = vmatpush1.msra.mxu0 0.0
    %944 = vmatprep.subr.mxu0 0.0
    %945 = vmatpush1.msra.mxu0 0.0
    %946 = vmatprep.subr.mxu0 0.0
    %947 = vmatpush1.msra.mxu0 0.0
    %948 = vmatprep.subr.mxu0 0.0
    %949 = vmatpush1.msra.mxu0 0.0
    %950 = vmatprep.subr.mxu0 0.0
    %951 = vmatpush1.msra.mxu0 0.0
    %952 = vmatprep.subr.mxu0 0.0
    %953 = vmatpush1.msra.mxu0 0.0
    %954 = vmatprep.subr.mxu0 0.0
    %955 = vmatpush1.msra.mxu0 0.0
    %956 = vmatprep.subr.mxu0 0.0
    %957 = vmatpush1.msra.mxu0 0.0
    %958 = vmatprep.subr.mxu0 0.0
    %959 = vmatpush1.msra.mxu0 0.0
    %960 = vmatprep.subr.mxu0 0.0
    %961 = vmatpush1.msra.mxu0 0.0
    %962 = vmatprep.subr.mxu0 0.0
    %963 = vmatpush1.msra.mxu0 0.0
    %964 = vmatprep.subr.mxu0 0.0
    %965 = vmatpush1.msra.mxu0 0.0
    %966 = vmatprep.mubr.f32.mxu0 0.0
    %967 = vmatmul.mubr.f32.gmra.mrb[0].mxu0 %v885
    %v968 = vpop.f32.mrb[0].mxu0
    %v969 = vadd.f32 0.0, %v968
    %v970 = vpop.f32.mrb[0].mxu0
    %v971 = vadd.f32 0.0, %v970
    %972 = vmatprep.mubr.f32.mxu0 0.0
    %973 = vmatmul.mubr.f32.gmra.mrb[0].mxu0 %v888
    %v974 = vpop.f32.mrb[0].mxu0
    %v975 = vadd.f32 0.0, %v974
    %v976 = vpop.f32.mrb[0].mxu0
    %v977 = vadd.f32 0.0, %v976
    %978 = vmatprep.mubr.f32.mxu0 0.0
    %979 = vmatmul.mubr.f32.gmra.mrb[0].mxu0 %v891
    %v980 = vpop.f32.mrb[0].mxu0
    %v981 = vadd.f32 0.0, %v980
    %v982 = vpop.f32.mrb[0].mxu0
    %v983 = vadd.f32 0.0, %v982
    %984 = vmatprep.mubr.f32.mxu0 0.0
    %985 = vmatmul.mubr.f32.gmra.mrb[0].mxu0 %v894
    %v986 = vpop.f32.mrb[0].mxu0
    %v987 = vadd.f32 0.0, %v986
    %v988 = vpop.f32.mrb[0].mxu0
    %v989 = vadd.f32 0.0, %v988
    %990 = vmatprep.mubr.f32.mxu0 0.0
    %991 = vmatmul.mubr.f32.gmra.mrb[0].mxu0 %v897
    %v992 = vpop.f32.mrb[0].mxu0
    %v993 = vadd.f32 0.0, %v992
    %v994 = vpop.f32.mrb[0].mxu0
    %v995 = vadd.f32 0.0, %v994
    %996 = vmatprep.mubr.f32.mxu0 0.0
    %997 = vmatmul.mubr.f32.gmra.mrb[0].mxu0 %v900
    %v998 = vpop.f32.mrb[0].mxu0
    %v999 = vadd.f32 0.0, %v998
    %v1000 = vpop.f32.mrb[0].mxu0
    %v1001 = vadd.f32 0.0, %v1000
    %1002 = vdwg.mxu0
    %v1003 = vadd.s32 %v114, 128
    %v1004 = vmul.u32 %v236, 32
    %vm1005 = vcmp.ge.s32.totalorder %v114, %v1004
    %vm1006 = vcmp.ge.s32.totalorder %v1003, %v1004
    %v1007 = vadd.s32 %v236, 1
    %v1008 = vmul.u32 %v1007, 32
    %vm1009 = vcmp.lt.s32.totalorder %v114, %v1008
    %vm1010 = vcmp.lt.s32.totalorder %v1003, %v1008
    %vm1011 = vmand %vm1005, %vm1009
    %vm1012 = vmand %vm1006, %vm1010
    %v1013 = vsel %vm1011, 1, 0
    %v1014 = vsel %vm1012, 1, 0
    %v1015 = vcvt.s32.f32 %v1013
    %v1016 = vcvt.s32.f32 %v1014
    %v1018 = vsel %vm640, %v878, 0
    %v1021 = vsel %vm640, %v879, 0
    %v1024 = vsel %vm640, %v880, 0
    %v1027 = vsel %vm640, %v881, 0
    %v1030 = vsel %vm640, %v882, 0
    %v1033 = vsel %vm640, %v883, 0
    %1035 = vmatprep.subr.mxu0 %v1016
    %1036 = vmatpush1.msra.mxu0 %v1015
    %1037 = vmatprep.subr.mxu0 0.0
    %1038 = vmatpush1.msra.mxu0 0.0
    %1039 = vmatprep.subr.mxu0 0.0
    %1040 = vmatpush1.msra.mxu0 0.0
    %1041 = vmatprep.subr.mxu0 0.0
    %1042 = vmatpush1.msra.mxu0 0.0
    %1043 = vmatprep.subr.mxu0 0.0
    %1044 = vmatpush1.msra.mxu0 0.0
    %1045 = vmatprep.subr.mxu0 0.0
    %1046 = vmatpush1.msra.mxu0 0.0
    %1047 = vmatprep.subr.mxu0 0.0
    %1048 = vmatpush1.msra.mxu0 0.0
    %1049 = vmatprep.subr.mxu0 0.0
    %1050 = vmatpush1.msra.mxu0 0.0
    %1051 = vmatprep.subr.mxu0 0.0
    %1052 = vmatpush1.msra.mxu0 0.0
    %1053 = vmatprep.subr.mxu0 0.0
    %1054 = vmatpush1.msra.mxu0 0.0
    %1055 = vmatprep.subr.mxu0 0.0
    %1056 = vmatpush1.msra.mxu0 0.0
    %1057 = vmatprep.subr.mxu0 0.0
    %1058 = vmatpush1.msra.mxu0 0.0
    %1059 = vmatprep.subr.mxu0 0.0
    %1060 = vmatpush1.msra.mxu0 0.0
    %1061 = vmatprep.subr.mxu0 0.0
    %1062 = vmatpush1.msra.mxu0 0.0
    %1063 = vmatprep.subr.mxu0 0.0
    %1064 = vmatpush1.msra.mxu0 0.0
    %1065 = vmatprep.subr.mxu0 0.0
    %1066 = vmatpush1.msra.mxu0 0.0
    %1067 = vmatprep.subr.mxu0 0.0
    %1068 = vmatpush1.msra.mxu0 0.0
    %1069 = vmatprep.subr.mxu0 0.0
    %1070 = vmatpush1.msra.mxu0 0.0
    %1071 = vmatprep.subr.mxu0 0.0
    %1072 = vmatpush1.msra.mxu0 0.0
    %1073 = vmatprep.subr.mxu0 0.0
    %1074 = vmatpush1.msra.mxu0 0.0
    %1075 = vmatprep.subr.mxu0 0.0
    %1076 = vmatpush1.msra.mxu0 0.0
    %1077 = vmatprep.subr.mxu0 0.0
    %1078 = vmatpush1.msra.mxu0 0.0
    %1079 = vmatprep.subr.mxu0 0.0
    %1080 = vmatpush1.msra.mxu0 0.0
    %1081 = vmatprep.subr.mxu0 0.0
    %1082 = vmatpush1.msra.mxu0 0.0
    %1083 = vmatprep.subr.mxu0 0.0
    %1084 = vmatpush1.msra.mxu0 0.0
    %1085 = vmatprep.subr.mxu0 0.0
    %1086 = vmatpush1.msra.mxu0 0.0
    %1087 = vmatprep.subr.mxu0 0.0
    %1088 = vmatpush1.msra.mxu0 0.0
    %1089 = vmatprep.subr.mxu0 0.0
    %1090 = vmatpush1.msra.mxu0 0.0
    %1091 = vmatprep.subr.mxu0 0.0
    %1092 = vmatpush1.msra.mxu0 0.0
    %1093 = vmatprep.subr.mxu0 0.0
    %1094 = vmatpush1.msra.mxu0 0.0
    %1095 = vmatprep.subr.mxu0 0.0
    %1096 = vmatpush1.msra.mxu0 0.0
    %1097 = vmatprep.subr.mxu0 0.0
    %1098 = vmatpush1.msra.mxu0 0.0
    %1099 = vmatprep.mubr.f32.mxu0 0.0
    %1100 = vmatmul.mubr.f32.gmra.mrb[0].mxu0 %v1018
    %v1101 = vpop.f32.mrb[0].mxu0
    %v1102 = vadd.f32 0.0, %v1101
    %v1103 = vpop.f32.mrb[0].mxu0
    %v1104 = vadd.f32 0.0, %v1103
    %1105 = vmatprep.mubr.f32.mxu0 0.0
    %1106 = vmatmul.mubr.f32.gmra.mrb[0].mxu0 %v1021
    %v1107 = vpop.f32.mrb[0].mxu0
    %v1108 = vadd.f32 0.0, %v1107
    %v1109 = vpop.f32.mrb[0].mxu0
    %v1110 = vadd.f32 0.0, %v1109
    %1111 = vmatprep.mubr.f32.mxu0 0.0
    %1112 = vmatmul.mubr.f32.gmra.mrb[0].mxu0 %v1024
    %v1113 = vpop.f32.mrb[0].mxu0
    %v1114 = vadd.f32 0.0, %v1113
    %v1115 = vpop.f32.mrb[0].mxu0
    %v1116 = vadd.f32 0.0, %v1115
    %1117 = vmatprep.mubr.f32.mxu0 0.0
    %1118 = vmatmul.mubr.f32.gmra.mrb[0].mxu0 %v1027
    %v1119 = vpop.f32.mrb[0].mxu0
    %v1120 = vadd.f32 0.0, %v1119
    %v1121 = vpop.f32.mrb[0].mxu0
    %v1122 = vadd.f32 0.0, %v1121
    %1123 = vmatprep.mubr.f32.mxu0 0.0
    %1124 = vmatmul.mubr.f32.gmra.mrb[0].mxu0 %v1030
    %v1125 = vpop.f32.mrb[0].mxu0
    %v1126 = vadd.f32 0.0, %v1125
    %v1127 = vpop.f32.mrb[0].mxu0
    %v1128 = vadd.f32 0.0, %v1127
    %1129 = vmatprep.mubr.f32.mxu0 0.0
    %1130 = vmatmul.mubr.f32.gmra.mrb[0].mxu0 %v1033
    %v1131 = vpop.f32.mrb[0].mxu0
    %v1132 = vadd.f32 0.0, %v1131
    %v1133 = vpop.f32.mrb[0].mxu0
    %v1134 = vadd.f32 0.0, %v1133
    %1135 = vdwg.mxu0
    %v1136 = vmul.f32 %v1102, %v969
    %v1137 = vmul.f32 %v1104, %v971
    %v1138 = vmul.f32 %v1108, %v975
    %v1139 = vmul.f32 %v1110, %v977
    %v1140 = vmul.f32 %v1114, %v981
    %v1141 = vmul.f32 %v1116, %v983
    %v1142 = vmul.f32 %v1120, %v987
    %v1143 = vmul.f32 %v1122, %v989
    %v1144 = vmul.f32 %v1126, %v993
    %v1145 = vmul.f32 %v1128, %v995
    %v1146 = vmul.f32 %v1132, %v999
    %v1147 = vmul.f32 %v1134, %v1001
    %v1148 = vld [vmem:[#allocation7] sm:$0x3]
    %v1150 = vlaneseq
    %v1151 = vshrl.u32 %v1150, 7
    %v1152 = vsub.s32 0, %v1151
    %v1153 = vrot.slane %v1148, %v1152
    %v1154 = vlaneseq
    %v1155 = vshrl.u32 %v1154, 7
    %v1156 = vsub.s32 1, %v1155
    %v1157 = vrot.slane %v1148, %v1156
    %1160 = vmatprep.subr.mxu0 %v1137
    %1161 = vmatpush1.msra.mxu0 %v1136
    %1162 = vmatprep.subr.mxu0 %v1139
    %1163 = vmatpush1.msra.mxu0 %v1138
    %1164 = vmatprep.subr.mxu0 %v1141
    %1165 = vmatpush1.msra.mxu0 %v1140
    %1166 = vmatprep.subr.mxu0 %v1143
    %1167 = vmatpush1.msra.mxu0 %v1142
    %1168 = vmatprep.subr.mxu0 %v1145
    %1169 = vmatpush1.msra.mxu0 %v1144
    %1170 = vmatprep.subr.mxu0 %v1147
    %1171 = vmatpush1.msra.mxu0 %v1146
    %1172 = vmatprep.subr.mxu0 0.0
    %1173 = vmatpush1.msra.mxu0 0.0
    %1174 = vmatprep.subr.mxu0 0.0
    %1175 = vmatpush1.msra.mxu0 0.0
    %1176 = vmatprep.subr.mxu0 0.0
    %1177 = vmatpush1.msra.mxu0 0.0
    %1178 = vmatprep.subr.mxu0 0.0
    %1179 = vmatpush1.msra.mxu0 0.0
    %1180 = vmatprep.subr.mxu0 0.0
    %1181 = vmatpush1.msra.mxu0 0.0
    %1182 = vmatprep.subr.mxu0 0.0
    %1183 = vmatpush1.msra.mxu0 0.0
    %1184 = vmatprep.subr.mxu0 0.0
    %1185 = vmatpush1.msra.mxu0 0.0
    %1186 = vmatprep.subr.mxu0 0.0
    %1187 = vmatpush1.msra.mxu0 0.0
    %1188 = vmatprep.subr.mxu0 0.0
    %1189 = vmatpush1.msra.mxu0 0.0
    %1190 = vmatprep.subr.mxu0 0.0
    %1191 = vmatpush1.msra.mxu0 0.0
    %1192 = vmatprep.subr.mxu0 0.0
    %1193 = vmatpush1.msra.mxu0 0.0
    %1194 = vmatprep.subr.mxu0 0.0
    %1195 = vmatpush1.msra.mxu0 0.0
    %1196 = vmatprep.subr.mxu0 0.0
    %1197 = vmatpush1.msra.mxu0 0.0
    %1198 = vmatprep.subr.mxu0 0.0
    %1199 = vmatpush1.msra.mxu0 0.0
    %1200 = vmatprep.subr.mxu0 0.0
    %1201 = vmatpush1.msra.mxu0 0.0
    %1202 = vmatprep.subr.mxu0 0.0
    %1203 = vmatpush1.msra.mxu0 0.0
    %1204 = vmatprep.subr.mxu0 0.0
    %1205 = vmatpush1.msra.mxu0 0.0
    %1206 = vmatprep.subr.mxu0 0.0
    %1207 = vmatpush1.msra.mxu0 0.0
    %1208 = vmatprep.subr.mxu0 0.0
    %1209 = vmatpush1.msra.mxu0 0.0
    %1210 = vmatprep.subr.mxu0 0.0
    %1211 = vmatpush1.msra.mxu0 0.0
    %1212 = vmatprep.subr.mxu0 0.0
    %1213 = vmatpush1.msra.mxu0 0.0
    %1214 = vmatprep.subr.mxu0 0.0
    %1215 = vmatpush1.msra.mxu0 0.0
    %1216 = vmatprep.subr.mxu0 0.0
    %1217 = vmatpush1.msra.mxu0 0.0
    %1218 = vmatprep.subr.mxu0 0.0
    %1219 = vmatpush1.msra.mxu0 0.0
    %1220 = vmatprep.subr.mxu0 0.0
    %1221 = vmatpush1.msra.mxu0 0.0
    %1222 = vmatprep.subr.mxu0 0.0
    %1223 = vmatpush1.msra.mxu0 0.0
    %1224 = vmatprep.mubr.f32.mxu0 0.0
    %1225 = vmatmul.mubr.f32.gmra.mrb[0].mxu0 %v678
    %v1226 = vpop.f32.mrb[0].mxu0
    %v1227 = vadd.f32 %v1153, %v1226
    %v1228 = vpop.f32.mrb[0].mxu0
    %v1229 = vadd.f32 %v1157, %v1228
    %1230 = vmatprep.mubr.f32.mxu0 0.0
    %1231 = vmatmul.mubr.f32.gmra.mrb[0].mxu0 %v681
    %v1232 = vpop.f32.mrb[0].mxu0
    %v1233 = vadd.f32 %v1153, %v1232
    %v1234 = vpop.f32.mrb[0].mxu0
    %v1235 = vadd.f32 %v1157, %v1234
    %1236 = vdwg.mxu0
    %vm1237 = vcmp.gt.f32.partialorder %v1227, 0.0
    %vm1238 = vcmp.gt.f32.partialorder %v1229, 0.0
    %vm1239 = vcmp.gt.f32.partialorder %v1233, 0.0
    %vm1240 = vcmp.gt.f32.partialorder %v1235, 0.0
    %v1241 = vmul.f32 %v1227, 1.442695
    %v1242 = vpow.pop %v1241
    %v1243 = vmul.f32 %v1229, 1.442695
    %v1244 = vpow.pop %v1243
    %v1245 = vmul.f32 %v1233, 1.442695
    %v1246 = vpow.pop %v1245
    %v1247 = vmul.f32 %v1235, 1.442695
    %v1248 = vpow.pop %v1247
    %v1249 = vsub.f32 %v1242, 1.0
    %v1250 = vsub.f32 %v1244, 1.0
    %v1251 = vsub.f32 %v1246, 1.0
    %v1252 = vsub.f32 %v1248, 1.0
    %v1253 = vsel %vm1237, %v1227, %v1249
    %v1254 = vsel %vm1238, %v1229, %v1250
    %v1255 = vsel %vm1239, %v1233, %v1251
    %v1256 = vsel %vm1240, %v1235, %v1252
    %v1257 = vld [vmem:[#allocation8] sm:$0xff]
    %v1258 = vld [vmem:[#allocation8 + $0x8] sm:$0xff]
    %v1259 = vld [vmem:[#allocation8 + $0x10] sm:$0xff]
    %v1260 = vld [vmem:[#allocation8 + $0x18] sm:$0xff]
    %v1261 = vld [vmem:[#allocation8 + $0x20] sm:$0xff]
    %v1262 = vld [vmem:[#allocation8 + $0x28] sm:$0xff]
    %v1263 = vld [vmem:[#allocation8 + $0x30] sm:$0xff]
    %v1264 = vld [vmem:[#allocation8 + $0x38] sm:$0xff]
    %v1265 = vld [vmem:[#allocation8 + $0x40] sm:$0xff]
    %v1266 = vld [vmem:[#allocation8 + $0x48] sm:$0xff]
    %v1267 = vld [vmem:[#allocation8 + $0x50] sm:$0xff]
    %v1268 = vld [vmem:[#allocation8 + $0x58] sm:$0xff]
    %v1269 = vld [vmem:[#allocation8 + $0x60] sm:$0xff]
    %v1270 = vld [vmem:[#allocation8 + $0x68] sm:$0xff]
    %v1271 = vld [vmem:[#allocation8 + $0x70] sm:$0xff]
    %v1272 = vld [vmem:[#allocation8 + $0x78] sm:$0xff]
    %v1273 = vld [vmem:[#allocation8 + $0x80] sm:$0xff]
    %v1274 = vld [vmem:[#allocation8 + $0x88] sm:$0xff]
    %v1275 = vld [vmem:[#allocation8 + $0x90] sm:$0xff]
    %v1276 = vld [vmem:[#allocation8 + $0x98] sm:$0xff]
    %v1277 = vld [vmem:[#allocation8 + $0xa0] sm:$0xff]
    %v1278 = vld [vmem:[#allocation8 + $0xa8] sm:$0xff]
    %v1279 = vld [vmem:[#allocation8 + $0xb0] sm:$0xff]
    %v1280 = vld [vmem:[#allocation8 + $0xb8] sm:$0xff]
    %v1281 = vld [vmem:[#allocation8 + $0xc0] sm:$0xff]
    %v1282 = vld [vmem:[#allocation8 + $0xc8] sm:$0xff]
    %v1283 = vld [vmem:[#allocation8 + $0xd0] sm:$0xff]
    %v1284 = vld [vmem:[#allocation8 + $0xd8] sm:$0xff]
    %v1285 = vld [vmem:[#allocation8 + $0xe0] sm:$0xff]
    %v1286 = vld [vmem:[#allocation8 + $0xe8] sm:$0xff]
    %v1287 = vld [vmem:[#allocation8 + $0xf0] sm:$0xff]
    %v1288 = vld [vmem:[#allocation8 + $0xf8] sm:$0xff]
    %1289 = vmatprep.subr.mxu0 0.0
    %1290 = vmatpush1.msra.mxu0 %v1257
    %1291 = vmatprep.subr.mxu0 0.0
    %1292 = vmatpush1.msra.mxu0 %v1258
    %1293 = vmatprep.subr.mxu0 0.0
    %1294 = vmatpush1.msra.mxu0 %v1259
    %1295 = vmatprep.subr.mxu0 0.0
    %1296 = vmatpush1.msra.mxu0 %v1260
    %1297 = vmatprep.subr.mxu0 0.0
    %1298 = vmatpush1.msra.mxu0 %v1261
    %1299 = vmatprep.subr.mxu0 0.0
    %1300 = vmatpush1.msra.mxu0 %v1262
    %1301 = vmatprep.subr.mxu0 0.0
    %1302 = vmatpush1.msra.mxu0 %v1263
    %1303 = vmatprep.subr.mxu0 0.0
    %1304 = vmatpush1.msra.mxu0 %v1264
    %1305 = vmatprep.subr.mxu0 0.0
    %1306 = vmatpush1.msra.mxu0 %v1265
    %1307 = vmatprep.subr.mxu0 0.0
    %1308 = vmatpush1.msra.mxu0 %v1266
    %1309 = vmatprep.subr.mxu0 0.0
    %1310 = vmatpush1.msra.mxu0 %v1267
    %1311 = vmatprep.subr.mxu0 0.0
    %1312 = vmatpush1.msra.mxu0 %v1268
    %1313 = vmatprep.subr.mxu0 0.0
    %1314 = vmatpush1.msra.mxu0 %v1269
    %1315 = vmatprep.subr.mxu0 0.0
    %1316 = vmatpush1.msra.mxu0 %v1270
    %1317 = vmatprep.subr.mxu0 0.0
    %1318 = vmatpush1.msra.mxu0 %v1271
    %1319 = vmatprep.subr.mxu0 0.0
    %1320 = vmatpush1.msra.mxu0 %v1272
    %1321 = vmatprep.subr.mxu0 0.0
    %1322 = vmatpush1.msra.mxu0 %v1273
    %1323 = vmatprep.subr.mxu0 0.0
    %1324 = vmatpush1.msra.mxu0 %v1274
    %1325 = vmatprep.subr.mxu0 0.0
    %1326 = vmatpush1.msra.mxu0 %v1275
    %1327 = vmatprep.subr.mxu0 0.0
    %1328 = vmatpush1.msra.mxu0 %v1276
    %1329 = vmatprep.subr.mxu0 0.0
    %1330 = vmatpush1.msra.mxu0 %v1277
    %1331 = vmatprep.subr.mxu0 0.0
    %1332 = vmatpush1.msra.mxu0 %v1278
    %1333 = vmatprep.subr.mxu0 0.0
    %1334 = vmatpush1.msra.mxu0 %v1279
    %1335 = vmatprep.subr.mxu0 0.0
    %1336 = vmatpush1.msra.mxu0 %v1280
    %1337 = vmatprep.subr.mxu0 0.0
    %1338 = vmatpush1.msra.mxu0 %v1281
    %1339 = vmatprep.subr.mxu0 0.0
    %1340 = vmatpush1.msra.mxu0 %v1282
    %1341 = vmatprep.subr.mxu0 0.0
    %1342 = vmatpush1.msra.mxu0 %v1283
    %1343 = vmatprep.subr.mxu0 0.0
    %1344 = vmatpush1.msra.mxu0 %v1284
    %1345 = vmatprep.subr.mxu0 0.0
    %1346 = vmatpush1.msra.mxu0 %v1285
    %1347 = vmatprep.subr.mxu0 0.0
    %1348 = vmatpush1.msra.mxu0 %v1286
    %1349 = vmatprep.subr.mxu0 0.0
    %1350 = vmatpush1.msra.mxu0 %v1287
    %1351 = vmatprep.subr.mxu0 0.0
    %1352 = vmatpush1.msra.mxu0 %v1288
    %1353 = vmatprep.mubr.f32.mxu0 %v1254
    %1354 = vmatmul.mubr.f32.gmra.mrb[0].mxu0 %v1253
    %v1355 = vpop.f32.mrb[0].mxu0
    %v1356 = vadd.f32 0.0, %v1355
    %v1357 = vpop.f32.mrb[0].mxu0
    %1358 = vmatprep.mubr.f32.mxu0 %v1256
    %1359 = vmatmul.mubr.f32.gmra.mrb[0].mxu0 %v1255
    %v1360 = vpop.f32.mrb[0].mxu0
    %v1361 = vadd.f32 0.0, %v1360
    %v1362 = vpop.f32.mrb[0].mxu0
    %1363 = vdwg.mxu0
    %v1364 = vld [vmem:[%s8] sm:$0xff]
    %v1365 = vld [vmem:[%s8 + $0x8] sm:$0xff]
    %v1366 = vld [vmem:[%s8 + $0x10] sm:$0xff]
    %v1367 = vld [vmem:[%s8 + $0x18] sm:$0xff]
    %v1368 = vld [vmem:[%s8 + $0x20] sm:$0xff]
    %v1369 = vld [vmem:[%s8 + $0x28] sm:$0xff]
    %v1370 = vld [vmem:[%s8 + $0x30] sm:$0xff]
    %v1371 = vld [vmem:[%s8 + $0x38] sm:$0xff]
    %v1372 = vld [vmem:[%s8 + $0x40] sm:$0xff]
    %v1373 = vld [vmem:[%s8 + $0x48] sm:$0xff]
    %v1374 = vld [vmem:[%s8 + $0x50] sm:$0xff]
    %v1375 = vld [vmem:[%s8 + $0x58] sm:$0xff]
    %v1376 = vld [vmem:[%s8 + $0x60] sm:$0xff]
    %v1377 = vld [vmem:[%s8 + $0x68] sm:$0xff]
    %v1378 = vld [vmem:[%s8 + $0x70] sm:$0xff]
    %v1379 = vld [vmem:[%s8 + $0x78] sm:$0xff]
    %1380 = vmatprep.subr.mxu0 0.0
    %1381 = vmatpush1.msra.mxu0 %v1364
    %1382 = vmatprep.subr.mxu0 0.0
    %1383 = vmatpush1.msra.mxu0 %v1365
    %1384 = vmatprep.subr.mxu0 0.0
    %1385 = vmatpush1.msra.mxu0 %v1366
    %1386 = vmatprep.subr.mxu0 0.0
    %1387 = vmatpush1.msra.mxu0 %v1367
    %1388 = vmatprep.subr.mxu0 0.0
    %1389 = vmatpush1.msra.mxu0 %v1368
    %1390 = vmatprep.subr.mxu0 0.0
    %1391 = vmatpush1.msra.mxu0 %v1369
    %1392 = vmatprep.subr.mxu0 0.0
    %1393 = vmatpush1.msra.mxu0 %v1370
    %1394 = vmatprep.subr.mxu0 0.0
    %1395 = vmatpush1.msra.mxu0 %v1371
    %1396 = vmatprep.subr.mxu0 0.0
    %1397 = vmatpush1.msra.mxu0 %v1372
    %1398 = vmatprep.subr.mxu0 0.0
    %1399 = vmatpush1.msra.mxu0 %v1373
    %1400 = vmatprep.subr.mxu0 0.0
    %1401 = vmatpush1.msra.mxu0 %v1374
    %1402 = vmatprep.subr.mxu0 0.0
    %1403 = vmatpush1.msra.mxu0 %v1375
    %1404 = vmatprep.subr.mxu0 0.0
    %1405 = vmatpush1.msra.mxu0 %v1376
    %1406 = vmatprep.subr.mxu0 0.0
    %1407 = vmatpush1.msra.mxu0 %v1377
    %1408 = vmatprep.subr.mxu0 0.0
    %1409 = vmatpush1.msra.mxu0 %v1378
    %1410 = vmatprep.subr.mxu0 0.0
    %1411 = vmatpush1.msra.mxu0 %v1379
    %1412 = vmatprep.subr.mxu0 0.0
    %1413 = vmatpush1.msra.mxu0 0.0
    %1414 = vmatprep.subr.mxu0 0.0
    %1415 = vmatpush1.msra.mxu0 0.0
    %1416 = vmatprep.subr.mxu0 0.0
    %1417 = vmatpush1.msra.mxu0 0.0
    %1418 = vmatprep.subr.mxu0 0.0
    %1419 = vmatpush1.msra.mxu0 0.0
    %1420 = vmatprep.subr.mxu0 0.0
    %1421 = vmatpush1.msra.mxu0 0.0
    %1422 = vmatprep.subr.mxu0 0.0
    %1423 = vmatpush1.msra.mxu0 0.0
    %1424 = vmatprep.subr.mxu0 0.0
    %1425 = vmatpush1.msra.mxu0 0.0
    %1426 = vmatprep.subr.mxu0 0.0
    %1427 = vmatpush1.msra.mxu0 0.0
    %1428 = vmatprep.subr.mxu0 0.0
    %1429 = vmatpush1.msra.mxu0 0.0
    %1430 = vmatprep.subr.mxu0 0.0
    %1431 = vmatpush1.msra.mxu0 0.0
    %1432 = vmatprep.subr.mxu0 0.0
    %1433 = vmatpush1.msra.mxu0 0.0
    %1434 = vmatprep.subr.mxu0 0.0
    %1435 = vmatpush1.msra.mxu0 0.0
    %1436 = vmatprep.subr.mxu0 0.0
    %1437 = vmatpush1.msra.mxu0 0.0
    %1438 = vmatprep.subr.mxu0 0.0
    %1439 = vmatpush1.msra.mxu0 0.0
    %1440 = vmatprep.subr.mxu0 0.0
    %1441 = vmatpush1.msra.mxu0 0.0
    %1442 = vmatprep.subr.mxu0 0.0
    %1443 = vmatpush1.msra.mxu0 0.0
    %1444 = vmatprep.mubr.f32.mxu0 0.0
    %1445 = vmatmul.mubr.f32.gmra.mrb[0].mxu0 %v1356
    %v1446 = vpop.f32.mrb[0].mxu0
    %v1447 = vadd.f32 0.0, %v1446
    %v1448 = vpop.f32.mrb[0].mxu0
    %1449 = vmatprep.mubr.f32.mxu0 0.0
    %1450 = vmatmul.mubr.f32.gmra.mrb[0].mxu0 %v1361
    %v1451 = vpop.f32.mrb[0].mxu0
    %v1452 = vadd.f32 0.0, %v1451
    %v1453 = vpop.f32.mrb[0].mxu0
    %1454 = vdwg.mxu0
    %1457 = vrot.lane.b32.xlu0 %v1447, 120
    %v1458 = vpop.permute.xlu0 %1457
    %1459 = vrot.lane.b32.xlu0 %v1452, 120
    %v1460 = vpop.permute.xlu0 %1459
    %1463 = vmatprep.subr.mxu0 0.0
    %1464 = vmatpush1.msra.mxu0 %v1447
    %1465 = vmatprep.subr.mxu0 0.0
    %1466 = vmatpush1.msra.mxu0 %v1452
    %1467 = vmatprep.subr.mxu0 0.0
    %1468 = vmatpush1.msra.mxu0 %v1458
    %1469 = vmatprep.subr.mxu0 0.0
    %1470 = vmatpush1.msra.mxu0 %v1460
    %1471 = vmatprep.subr.mxu0 0.0
    %1472 = vmatpush1.msra.mxu0 0.0
    %1473 = vmatprep.subr.mxu0 0.0
    %1474 = vmatpush1.msra.mxu0 0.0
    %1475 = vmatprep.subr.mxu0 0.0
    %1476 = vmatpush1.msra.mxu0 0.0
    %1477 = vmatprep.subr.mxu0 0.0
    %1478 = vmatpush1.msra.mxu0 0.0
    %1479 = vmatprep.subr.mxu0 0.0
    %1480 = vmatpush1.msra.mxu0 0.0
    %1481 = vmatprep.subr.mxu0 0.0
    %1482 = vmatpush1.msra.mxu0 0.0
    %1483 = vmatprep.subr.mxu0 0.0
    %1484 = vmatpush1.msra.mxu0 0.0
    %1485 = vmatprep.subr.mxu0 0.0
    %1486 = vmatpush1.msra.mxu0 0.0
    %1487 = vmatprep.subr.mxu0 0.0
    %1488 = vmatpush1.msra.mxu0 0.0
    %1489 = vmatprep.subr.mxu0 0.0
    %1490 = vmatpush1.msra.mxu0 0.0
    %1491 = vmatprep.subr.mxu0 0.0
    %1492 = vmatpush1.msra.mxu0 0.0
    %1493 = vmatprep.subr.mxu0 0.0
    %1494 = vmatpush1.msra.mxu0 0.0
    %1495 = vmatprep.subr.mxu0 0.0
    %1496 = vmatpush1.msra.mxu0 0.0
    %1497 = vmatprep.subr.mxu0 0.0
    %1498 = vmatpush1.msra.mxu0 0.0
    %1499 = vmatprep.subr.mxu0 0.0
    %1500 = vmatpush1.msra.mxu0 0.0
    %1501 = vmatprep.subr.mxu0 0.0
    %1502 = vmatpush1.msra.mxu0 0.0
    %1503 = vmatprep.subr.mxu0 0.0
    %1504 = vmatpush1.msra.mxu0 0.0
    %1505 = vmatprep.subr.mxu0 0.0
    %1506 = vmatpush1.msra.mxu0 0.0
    %1507 = vmatprep.subr.mxu0 0.0
    %1508 = vmatpush1.msra.mxu0 0.0
    %1509 = vmatprep.subr.mxu0 0.0
    %1510 = vmatpush1.msra.mxu0 0.0
    %1511 = vmatprep.subr.mxu0 0.0
    %1512 = vmatpush1.msra.mxu0 0.0
    %1513 = vmatprep.subr.mxu0 0.0
    %1514 = vmatpush1.msra.mxu0 0.0
    %1515 = vmatprep.subr.mxu0 0.0
    %1516 = vmatpush1.msra.mxu0 0.0
    %1517 = vmatprep.subr.mxu0 0.0
    %1518 = vmatpush1.msra.mxu0 0.0
    %1519 = vmatprep.subr.mxu0 0.0
    %1520 = vmatpush1.msra.mxu0 0.0
    %1521 = vmatprep.subr.mxu0 0.0
    %1522 = vmatpush1.msra.mxu0 0.0
    %1523 = vmatprep.subr.mxu0 0.0
    %1524 = vmatpush1.msra.mxu0 0.0
    %1525 = vmatprep.subr.mxu0 0.0
    %1526 = vmatpush1.msra.mxu0 0.0
    %1527 = vmatprep.mubr.f32.mxu0 0.0
    %1528 = vmatmul.mubr.f32.gmra.mrb[0].mxu0 %v510
    %v1529 = vpop.f32.mrb[0].mxu0
    %v1530 = vadd.f32 0.0, %v1529
    %v1531 = vpop.f32.mrb[0].mxu0
    %1532 = vmatprep.mubr.f32.mxu0 0.0
    %1533 = vmatmul.mubr.f32.gmra.mrb[0].mxu0 %v513
    %v1534 = vpop.f32.mrb[0].mxu0
    %v1535 = vadd.f32 0.0, %v1534
    %v1536 = vpop.f32.mrb[0].mxu0
    %1537 = vmatprep.mubr.f32.mxu0 0.0
    %1538 = vmatmul.mubr.f32.gmra.mrb[0].mxu0 %v516
    %v1539 = vpop.f32.mrb[0].mxu0
    %v1540 = vadd.f32 0.0, %v1539
    %v1541 = vpop.f32.mrb[0].mxu0
    %1542 = vmatprep.mubr.f32.mxu0 0.0
    %1543 = vmatmul.mubr.f32.gmra.mrb[0].mxu0 %v519
    %v1544 = vpop.f32.mrb[0].mxu0
    %v1545 = vadd.f32 0.0, %v1544
    %v1546 = vpop.f32.mrb[0].mxu0
    %1547 = vmatprep.mubr.f32.mxu0 0.0
    %1548 = vmatmul.mubr.f32.gmra.mrb[0].mxu0 %v522
    %v1549 = vpop.f32.mrb[0].mxu0
    %v1550 = vadd.f32 0.0, %v1549
    %v1551 = vpop.f32.mrb[0].mxu0
    %1552 = vmatprep.mubr.f32.mxu0 0.0
    %1553 = vmatmul.mubr.f32.gmra.mrb[0].mxu0 %v525
    %v1554 = vpop.f32.mrb[0].mxu0
    %v1555 = vadd.f32 0.0, %v1554
    %v1556 = vpop.f32.mrb[0].mxu0
    %1557 = vdwg.mxu0
    %vm1558 = vcmp.gt.f32.partialorder %v1530, 0.0
    %vm1559 = vcmp.gt.f32.partialorder %v1535, 0.0
    %vm1560 = vcmp.gt.f32.partialorder %v1540, 0.0
    %vm1561 = vcmp.gt.f32.partialorder %v1545, 0.0
    %vm1562 = vcmp.gt.f32.partialorder %v1550, 0.0
    %vm1563 = vcmp.gt.f32.partialorder %v1555, 0.0
    %v1564 = vmul.f32 %v1530, 0.2
    %v1565 = vmul.f32 %v1535, 0.2
    %v1566 = vmul.f32 %v1540, 0.2
    %v1567 = vmul.f32 %v1545, 0.2
    %v1568 = vmul.f32 %v1550, 0.2
    %v1569 = vmul.f32 %v1555, 0.2
    %v1570 = vsel %vm1558, %v1530, %v1564
    %v1571 = vsel %vm1559, %v1535, %v1565
    %v1572 = vsel %vm1560, %v1540, %v1566
    %v1573 = vsel %vm1561, %v1545, %v1567
    %v1574 = vsel %vm1562, %v1550, %v1568
    %v1575 = vsel %vm1563, %v1555, %v1569
    %v1576 = vsel %vm640, %v1570, -inf
    %v1577 = vsel %vm640, %v1571, -inf
    %v1578 = vsel %vm640, %v1572, -inf
    %v1579 = vsel %vm640, %v1573, -inf
    %v1580 = vsel %vm640, %v1574, -inf
    %v1581 = vmax.f32 %v1576, %v1580
    %v1582 = vsel %vm640, %v1575, -inf
    %v1583 = vmax.f32 %v1577, %v1582
    %v1584 = vmax.f32 %v1581, %v1583
    %v1585 = vmax.f32 %v1578, %v1579
    %v1586 = vmax.f32 %v1584, %v1585
    %v1587 = vrot.slane %v1586, 4
    %v1588 = vmax.f32 %v1586, %v1587
    %v1589 = vrot.slane %v1588, 2
    %v1590 = vmax.f32 %v1588, %v1589
    %v1591 = vrot.slane %v1590, 1
    %v1592 = vmax.f32 %v1590, %v1591
    %v1593 = vsub.f32 %v1570, %v1592
    %v1594 = vsub.f32 %v1571, %v1592
    %v1595 = vsub.f32 %v1572, %v1592
    %v1596 = vsub.f32 %v1573, %v1592
    %v1597 = vsub.f32 %v1574, %v1592
    %v1598 = vsub.f32 %v1575, %v1592
    %v1599 = vmul.f32 %v1593, 1.442695
    %v1600 = vpow.pop %v1599
    %v1601 = vmul.f32 %v1594, 1.442695
    %v1602 = vpow.pop %v1601
    %v1603 = vmul.f32 %v1595, 1.442695
    %v1604 = vpow.pop %v1603
    %v1605 = vmul.f32 %v1596, 1.442695
    %v1606 = vpow.pop %v1605
    %v1607 = vmul.f32 %v1597, 1.442695
    %v1608 = vpow.pop %v1607
    %v1609 = vmul.f32 %v1598, 1.442695
    %v1610 = vpow.pop %v1609
    %1611 = vmatprep.subr.mxu0 0.0
    %1612 = vmatpush1.msra.mxu0 %v1600
    %1613 = vmatprep.subr.mxu0 0.0
    %1614 = vmatpush1.msra.mxu0 %v1602
    %1615 = vmatprep.subr.mxu0 0.0
    %1616 = vmatpush1.msra.mxu0 %v1604
    %1617 = vmatprep.subr.mxu0 0.0
    %1618 = vmatpush1.msra.mxu0 %v1606
    %1619 = vmatprep.subr.mxu0 0.0
    %1620 = vmatpush1.msra.mxu0 %v1608
    %1621 = vmatprep.subr.mxu0 0.0
    %1622 = vmatpush1.msra.mxu0 %v1610
    %1623 = vmatprep.subr.mxu0 0.0
    %1624 = vmatpush1.msra.mxu0 0.0
    %1625 = vmatprep.subr.mxu0 0.0
    %1626 = vmatpush1.msra.mxu0 0.0
    %1627 = vmatprep.subr.mxu0 0.0
    %1628 = vmatpush1.msra.mxu0 0.0
    %1629 = vmatprep.subr.mxu0 0.0
    %1630 = vmatpush1.msra.mxu0 0.0
    %1631 = vmatprep.subr.mxu0 0.0
    %1632 = vmatpush1.msra.mxu0 0.0
    %1633 = vmatprep.subr.mxu0 0.0
    %1634 = vmatpush1.msra.mxu0 0.0
    %1635 = vmatprep.subr.mxu0 0.0
    %1636 = vmatpush1.msra.mxu0 0.0
    %1637 = vmatprep.subr.mxu0 0.0
    %1638 = vmatpush1.msra.mxu0 0.0
    %1639 = vmatprep.subr.mxu0 0.0
    %1640 = vmatpush1.msra.mxu0 0.0
    %1641 = vmatprep.subr.mxu0 0.0
    %1642 = vmatpush1.msra.mxu0 0.0
    %1643 = vmatprep.subr.mxu0 0.0
    %1644 = vmatpush1.msra.mxu0 0.0
    %1645 = vmatprep.subr.mxu0 0.0
    %1646 = vmatpush1.msra.mxu0 0.0
    %1647 = vmatprep.subr.mxu0 0.0
    %1648 = vmatpush1.msra.mxu0 0.0
    %1649 = vmatprep.subr.mxu0 0.0
    %1650 = vmatpush1.msra.mxu0 0.0
    %1651 = vmatprep.subr.mxu0 0.0
    %1652 = vmatpush1.msra.mxu0 0.0
    %1653 = vmatprep.subr.mxu0 0.0
    %1654 = vmatpush1.msra.mxu0 0.0
    %1655 = vmatprep.subr.mxu0 0.0
    %1656 = vmatpush1.msra.mxu0 0.0
    %1657 = vmatprep.subr.mxu0 0.0
    %1658 = vmatpush1.msra.mxu0 0.0
    %1659 = vmatprep.subr.mxu0 0.0
    %1660 = vmatpush1.msra.mxu0 0.0
    %1661 = vmatprep.subr.mxu0 0.0
    %1662 = vmatpush1.msra.mxu0 0.0
    %1663 = vmatprep.subr.mxu0 0.0
    %1664 = vmatpush1.msra.mxu0 0.0
    %1665 = vmatprep.subr.mxu0 0.0
    %1666 = vmatpush1.msra.mxu0 0.0
    %1667 = vmatprep.subr.mxu0 0.0
    %1668 = vmatpush1.msra.mxu0 0.0
    %1669 = vmatprep.subr.mxu0 0.0
    %1670 = vmatpush1.msra.mxu0 0.0
    %1671 = vmatprep.subr.mxu0 0.0
    %1672 = vmatpush1.msra.mxu0 0.0
    %1673 = vmatprep.subr.mxu0 0.0
    %1674 = vmatpush1.msra.mxu0 0.0
    %1675 = vmatprep.mubr.f32.mxu0 0.0
    %1676 = vmatmul.mubr.f32.gmra.mrb[0].mxu0 %v678
    %v1677 = vpop.f32.mrb[0].mxu0
    %v1678 = vadd.f32 0.0, %v1677
    %v1679 = vpop.f32.mrb[0].mxu0
    %1680 = vmatprep.mubr.f32.mxu0 0.0
    %1681 = vmatmul.mubr.f32.gmra.mrb[0].mxu0 %v681
    %v1682 = vpop.f32.mrb[0].mxu0
    %v1683 = vadd.f32 0.0, %v1682
    %v1684 = vpop.f32.mrb[0].mxu0
    %1685 = vdwg.mxu0
    %1686 = vmatprep.subr.mxu0 0.0
    %1687 = vmatpush1.msra.mxu0 %v1678
    %1688 = vmatprep.subr.mxu0 0.0
    %1689 = vmatpush1.msra.mxu0 %v1683
    %1690 = vmatprep.subr.mxu0 0.0
    %1691 = vmatpush1.msra.mxu0 0.0
    %1692 = vmatprep.subr.mxu0 0.0
    %1693 = vmatpush1.msra.mxu0 0.0
    %1694 = vmatprep.subr.mxu0 0.0
    %1695 = vmatpush1.msra.mxu0 0.0
    %1696 = vmatprep.subr.mxu0 0.0
    %1697 = vmatpush1.msra.mxu0 0.0
    %1698 = vmatprep.subr.mxu0 0.0
    %1699 = vmatpush1.msra.mxu0 0.0
    %1700 = vmatprep.subr.mxu0 0.0
    %1701 = vmatpush1.msra.mxu0 0.0
    %1702 = vmatprep.subr.mxu0 0.0
    %1703 = vmatpush1.msra.mxu0 0.0
    %1704 = vmatprep.subr.mxu0 0.0
    %1705 = vmatpush1.msra.mxu0 0.0
    %1706 = vmatprep.subr.mxu0 0.0
    %1707 = vmatpush1.msra.mxu0 0.0
    %1708 = vmatprep.subr.mxu0 0.0
    %1709 = vmatpush1.msra.mxu0 0.0
    %1710 = vmatprep.subr.mxu0 0.0
    %1711 = vmatpush1.msra.mxu0 0.0
    %1712 = vmatprep.subr.mxu0 0.0
    %1713 = vmatpush1.msra.mxu0 0.0
    %1714 = vmatprep.subr.mxu0 0.0
    %1715 = vmatpush1.msra.mxu0 0.0
    %1716 = vmatprep.subr.mxu0 0.0
    %1717 = vmatpush1.msra.mxu0 0.0
    %1718 = vmatprep.subr.mxu0 0.0
    %1719 = vmatpush1.msra.mxu0 0.0
    %1720 = vmatprep.subr.mxu0 0.0
    %1721 = vmatpush1.msra.mxu0 0.0
    %1722 = vmatprep.subr.mxu0 0.0
    %1723 = vmatpush1.msra.mxu0 0.0
    %1724 = vmatprep.subr.mxu0 0.0
    %1725 = vmatpush1.msra.mxu0 0.0
    %1726 = vmatprep.subr.mxu0 0.0
    %1727 = vmatpush1.msra.mxu0 0.0
    %1728 = vmatprep.subr.mxu0 0.0
    %1729 = vmatpush1.msra.mxu0 0.0
    %1730 = vmatprep.subr.mxu0 0.0
    %1731 = vmatpush1.msra.mxu0 0.0
    %1732 = vmatprep.subr.mxu0 0.0
    %1733 = vmatpush1.msra.mxu0 0.0
    %1734 = vmatprep.subr.mxu0 0.0
    %1735 = vmatpush1.msra.mxu0 0.0
    %1736 = vmatprep.subr.mxu0 0.0
    %1737 = vmatpush1.msra.mxu0 0.0
    %1738 = vmatprep.subr.mxu0 0.0
    %1739 = vmatpush1.msra.mxu0 0.0
    %1740 = vmatprep.subr.mxu0 0.0
    %1741 = vmatpush1.msra.mxu0 0.0
    %1742 = vmatprep.subr.mxu0 0.0
    %1743 = vmatpush1.msra.mxu0 0.0
    %1744 = vmatprep.subr.mxu0 0.0
    %1745 = vmatpush1.msra.mxu0 0.0
    %1746 = vmatprep.subr.mxu0 0.0
    %1747 = vmatpush1.msra.mxu0 0.0
    %1748 = vmatprep.subr.mxu0 0.0
    %1749 = vmatpush1.msra.mxu0 0.0
    %1750 = vmatprep.mubr.f32.mxu0 0.0
    %1751 = vmatmul.mubr.f32.gmra.mrb[0].mxu0 %v760
    %v1752 = vpop.f32.mrb[0].mxu0
    %v1753 = vadd.f32 0.0, %v1752
    %v1754 = vpop.f32.mrb[0].mxu0
    %1755 = vmatprep.mubr.f32.mxu0 0.0
    %1756 = vmatmul.mubr.f32.gmra.mrb[0].mxu0 %v763
    %v1757 = vpop.f32.mrb[0].mxu0
    %v1758 = vadd.f32 0.0, %v1757
    %v1759 = vpop.f32.mrb[0].mxu0
    %1760 = vmatprep.mubr.f32.mxu0 0.0
    %1761 = vmatmul.mubr.f32.gmra.mrb[0].mxu0 %v766
    %v1762 = vpop.f32.mrb[0].mxu0
    %v1763 = vadd.f32 0.0, %v1762
    %v1764 = vpop.f32.mrb[0].mxu0
    %1765 = vmatprep.mubr.f32.mxu0 0.0
    %1766 = vmatmul.mubr.f32.gmra.mrb[0].mxu0 %v769
    %v1767 = vpop.f32.mrb[0].mxu0
    %v1768 = vadd.f32 0.0, %v1767
    %v1769 = vpop.f32.mrb[0].mxu0
    %1770 = vmatprep.mubr.f32.mxu0 0.0
    %1771 = vmatmul.mubr.f32.gmra.mrb[0].mxu0 %v772
    %v1772 = vpop.f32.mrb[0].mxu0
    %v1773 = vadd.f32 0.0, %v1772
    %v1774 = vpop.f32.mrb[0].mxu0
    %1775 = vmatprep.mubr.f32.mxu0 0.0
    %1776 = vmatmul.mubr.f32.gmra.mrb[0].mxu0 %v775
    %v1777 = vpop.f32.mrb[0].mxu0
    %v1778 = vadd.f32 0.0, %v1777
    %v1779 = vpop.f32.mrb[0].mxu0
    %1780 = vdwg.mxu0
    %v1781 = vrcp.pop %v1753
    %v1782 = vrcp.pop %v1758
    %v1783 = vrcp.pop %v1763
    %v1784 = vrcp.pop %v1768
    %v1785 = vrcp.pop %v1773
    %v1786 = vrcp.pop %v1778
    %v1787 = vmul.f32 %v1600, %v1781
    %v1788 = vmul.f32 %v1602, %v1782
    %v1789 = vmul.f32 %v1604, %v1783
    %v1790 = vmul.f32 %v1606, %v1784
    %v1791 = vmul.f32 %v1608, %v1785
    %v1792 = vmul.f32 %v1610, %v1786
    %1793 = vmatprep.subr.mxu0 0.0
    %1794 = vmatpush1.msra.mxu0 %v1356
    %1795 = vmatprep.subr.mxu0 0.0
    %1796 = vmatpush1.msra.mxu0 %v1361
    %1797 = vmatprep.subr.mxu0 0.0
    %1798 = vmatpush1.msra.mxu0 0.0
    %1799 = vmatprep.subr.mxu0 0.0
    %1800 = vmatpush1.msra.mxu0 0.0
    %1801 = vmatprep.subr.mxu0 0.0
    %1802 = vmatpush1.msra.mxu0 0.0
    %1803 = vmatprep.subr.mxu0 0.0
    %1804 = vmatpush1.msra.mxu0 0.0
    %1805 = vmatprep.subr.mxu0 0.0
    %1806 = vmatpush1.msra.mxu0 0.0
    %1807 = vmatprep.subr.mxu0 0.0
    %1808 = vmatpush1.msra.mxu0 0.0
    %1809 = vmatprep.subr.mxu0 0.0
    %1810 = vmatpush1.msra.mxu0 0.0
    %1811 = vmatprep.subr.mxu0 0.0
    %1812 = vmatpush1.msra.mxu0 0.0
    %1813 = vmatprep.subr.mxu0 0.0
    %1814 = vmatpush1.msra.mxu0 0.0
    %1815 = vmatprep.subr.mxu0 0.0
    %1816 = vmatpush1.msra.mxu0 0.0
    %1817 = vmatprep.subr.mxu0 0.0
    %1818 = vmatpush1.msra.mxu0 0.0
    %1819 = vmatprep.subr.mxu0 0.0
    %1820 = vmatpush1.msra.mxu0 0.0
    %1821 = vmatprep.subr.mxu0 0.0
    %1822 = vmatpush1.msra.mxu0 0.0
    %1823 = vmatprep.subr.mxu0 0.0
    %1824 = vmatpush1.msra.mxu0 0.0
    %1825 = vmatprep.subr.mxu0 0.0
    %1826 = vmatpush1.msra.mxu0 0.0
    %1827 = vmatprep.subr.mxu0 0.0
    %1828 = vmatpush1.msra.mxu0 0.0
    %1829 = vmatprep.subr.mxu0 0.0
    %1830 = vmatpush1.msra.mxu0 0.0
    %1831 = vmatprep.subr.mxu0 0.0
    %1832 = vmatpush1.msra.mxu0 0.0
    %1833 = vmatprep.subr.mxu0 0.0
    %1834 = vmatpush1.msra.mxu0 0.0
    %1835 = vmatprep.subr.mxu0 0.0
    %1836 = vmatpush1.msra.mxu0 0.0
    %1837 = vmatprep.subr.mxu0 0.0
    %1838 = vmatpush1.msra.mxu0 0.0
    %1839 = vmatprep.subr.mxu0 0.0
    %1840 = vmatpush1.msra.mxu0 0.0
    %1841 = vmatprep.subr.mxu0 0.0
    %1842 = vmatpush1.msra.mxu0 0.0
    %1843 = vmatprep.subr.mxu0 0.0
    %1844 = vmatpush1.msra.mxu0 0.0
    %1845 = vmatprep.subr.mxu0 0.0
    %1846 = vmatpush1.msra.mxu0 0.0
    %1847 = vmatprep.subr.mxu0 0.0
    %1848 = vmatpush1.msra.mxu0 0.0
    %1849 = vmatprep.subr.mxu0 0.0
    %1850 = vmatpush1.msra.mxu0 0.0
    %1851 = vmatprep.subr.mxu0 0.0
    %1852 = vmatpush1.msra.mxu0 0.0
    %1853 = vmatprep.subr.mxu0 0.0
    %1854 = vmatpush1.msra.mxu0 0.0
    %1855 = vmatprep.subr.mxu0 0.0
    %1856 = vmatpush1.msra.mxu0 0.0
    %1857 = vmatprep.mubr.f32.mxu0 0.0
    %1858 = vmatmul.mubr.f32.gmra.mrb[0].mxu0 %v885
    %v1859 = vpop.f32.mrb[0].mxu0
    %v1860 = vadd.f32 0.0, %v1859
    %v1861 = vpop.f32.mrb[0].mxu0
    %1862 = vmatprep.mubr.f32.mxu0 0.0
    %1863 = vmatmul.mubr.f32.gmra.mrb[0].mxu0 %v888
    %v1864 = vpop.f32.mrb[0].mxu0
    %v1865 = vadd.f32 0.0, %v1864
    %v1866 = vpop.f32.mrb[0].mxu0
    %1867 = vmatprep.mubr.f32.mxu0 0.0
    %1868 = vmatmul.mubr.f32.gmra.mrb[0].mxu0 %v891
    %v1869 = vpop.f32.mrb[0].mxu0
    %v1870 = vadd.f32 0.0, %v1869
    %v1871 = vpop.f32.mrb[0].mxu0
    %1872 = vmatprep.mubr.f32.mxu0 0.0
    %1873 = vmatmul.mubr.f32.gmra.mrb[0].mxu0 %v894
    %v1874 = vpop.f32.mrb[0].mxu0
    %v1875 = vadd.f32 0.0, %v1874
    %v1876 = vpop.f32.mrb[0].mxu0
    %1877 = vmatprep.mubr.f32.mxu0 0.0
    %1878 = vmatmul.mubr.f32.gmra.mrb[0].mxu0 %v897
    %v1879 = vpop.f32.mrb[0].mxu0
    %v1880 = vadd.f32 0.0, %v1879
    %v1881 = vpop.f32.mrb[0].mxu0
    %1882 = vmatprep.mubr.f32.mxu0 0.0
    %1883 = vmatmul.mubr.f32.gmra.mrb[0].mxu0 %v900
    %v1884 = vpop.f32.mrb[0].mxu0
    %v1885 = vadd.f32 0.0, %v1884
    %v1886 = vpop.f32.mrb[0].mxu0
    %1887 = vdwg.mxu0
    %v1888 = vmul.u32 %v236, 16
    %vm1889 = vcmp.ge.s32.totalorder %v114, %v1888
    %v1890 = vmul.u32 %v1007, 16
    %vm1891 = vcmp.lt.s32.totalorder %v114, %v1890
    %vm1892 = vmand %vm1889, %vm1891
    %v1893 = vsel %vm1892, 1, 0
    %v1894 = vcvt.s32.f32 %v1893
    %v1896 = vsel %vm640, %v1787, 0
    %v1899 = vsel %vm640, %v1788, 0
    %v1902 = vsel %vm640, %v1789, 0
    %v1905 = vsel %vm640, %v1790, 0
    %v1908 = vsel %vm640, %v1791, 0
    %v1911 = vsel %vm640, %v1792, 0
    %1913 = vmatprep.subr.mxu0 0.0
    %1914 = vmatpush1.msra.mxu0 %v1894
    %1915 = vmatprep.subr.mxu0 0.0
    %1916 = vmatpush1.msra.mxu0 0.0
    %1917 = vmatprep.subr.mxu0 0.0
    %1918 = vmatpush1.msra.mxu0 0.0
    %1919 = vmatprep.subr.mxu0 0.0
    %1920 = vmatpush1.msra.mxu0 0.0
    %1921 = vmatprep.subr.mxu0 0.0
    %1922 = vmatpush1.msra.mxu0 0.0
    %1923 = vmatprep.subr.mxu0 0.0
    %1924 = vmatpush1.msra.mxu0 0.0
    %1925 = vmatprep.subr.mxu0 0.0
    %1926 = vmatpush1.msra.mxu0 0.0
    %1927 = vmatprep.subr.mxu0 0.0
    %1928 = vmatpush1.msra.mxu0 0.0
    %1929 = vmatprep.subr.mxu0 0.0
    %1930 = vmatpush1.msra.mxu0 0.0
    %1931 = vmatprep.subr.mxu0 0.0
    %1932 = vmatpush1.msra.mxu0 0.0
    %1933 = vmatprep.subr.mxu0 0.0
    %1934 = vmatpush1.msra.mxu0 0.0
    %1935 = vmatprep.subr.mxu0 0.0
    %1936 = vmatpush1.msra.mxu0 0.0
    %1937 = vmatprep.subr.mxu0 0.0
    %1938 = vmatpush1.msra.mxu0 0.0
    %1939 = vmatprep.subr.mxu0 0.0
    %1940 = vmatpush1.msra.mxu0 0.0
    %1941 = vmatprep.subr.mxu0 0.0
    %1942 = vmatpush1.msra.mxu0 0.0
    %1943 = vmatprep.subr.mxu0 0.0
    %1944 = vmatpush1.msra.mxu0 0.0
    %1945 = vmatprep.subr.mxu0 0.0
    %1946 = vmatpush1.msra.mxu0 0.0
    %1947 = vmatprep.subr.mxu0 0.0
    %1948 = vmatpush1.msra.mxu0 0.0
    %1949 = vmatprep.subr.mxu0 0.0
    %1950 = vmatpush1.msra.mxu0 0.0
    %1951 = vmatprep.subr.mxu0 0.0
    %1952 = vmatpush1.msra.mxu0 0.0
    %1953 = vmatprep.subr.mxu0 0.0
    %1954 = vmatpush1.msra.mxu0 0.0
    %1955 = vmatprep.subr.mxu0 0.0
    %1956 = vmatpush1.msra.mxu0 0.0
    %1957 = vmatprep.subr.mxu0 0.0
    %1958 = vmatpush1.msra.mxu0 0.0
    %1959 = vmatprep.subr.mxu0 0.0
    %1960 = vmatpush1.msra.mxu0 0.0
    %1961 = vmatprep.subr.mxu0 0.0
    %1962 = vmatpush1.msra.mxu0 0.0
    %1963 = vmatprep.subr.mxu0 0.0
    %1964 = vmatpush1.msra.mxu0 0.0
    %1965 = vmatprep.subr.mxu0 0.0
    %1966 = vmatpush1.msra.mxu0 0.0
    %1967 = vmatprep.subr.mxu0 0.0
    %1968 = vmatpush1.msra.mxu0 0.0
    %1969 = vmatprep.subr.mxu0 0.0
    %1970 = vmatpush1.msra.mxu0 0.0
    %1971 = vmatprep.subr.mxu0 0.0
    %1972 = vmatpush1.msra.mxu0 0.0
    %1973 = vmatprep.subr.mxu0 0.0
    %1974 = vmatpush1.msra.mxu0 0.0
    %1975 = vmatprep.subr.mxu0 0.0
    %1976 = vmatpush1.msra.mxu0 0.0
    %1977 = vmatprep.mubr.f32.mxu0 0.0
    %1978 = vmatmul.mubr.f32.gmra.mrb[0].mxu0 %v1896
    %v1979 = vpop.f32.mrb[0].mxu0
    %v1980 = vadd.f32 0.0, %v1979
    %v1981 = vpop.f32.mrb[0].mxu0
    %1982 = vmatprep.mubr.f32.mxu0 0.0
    %1983 = vmatmul.mubr.f32.gmra.mrb[0].mxu0 %v1899
    %v1984 = vpop.f32.mrb[0].mxu0
    %v1985 = vadd.f32 0.0, %v1984
    %v1986 = vpop.f32.mrb[0].mxu0
    %1987 = vmatprep.mubr.f32.mxu0 0.0
    %1988 = vmatmul.mubr.f32.gmra.mrb[0].mxu0 %v1902
    %v1989 = vpop.f32.mrb[0].mxu0
    %v1990 = vadd.f32 0.0, %v1989
    %v1991 = vpop.f32.mrb[0].mxu0
    %1992 = vmatprep.mubr.f32.mxu0 0.0
    %1993 = vmatmul.mubr.f32.gmra.mrb[0].mxu0 %v1905
    %v1994 = vpop.f32.mrb[0].mxu0
    %v1995 = vadd.f32 0.0, %v1994
    %v1996 = vpop.f32.mrb[0].mxu0
    %1997 = vmatprep.mubr.f32.mxu0 0.0
    %1998 = vmatmul.mubr.f32.gmra.mrb[0].mxu0 %v1908
    %v1999 = vpop.f32.mrb[0].mxu0
    %v2000 = vadd.f32 0.0, %v1999
    %v2001 = vpop.f32.mrb[0].mxu0
    %2002 = vmatprep.mubr.f32.mxu0 0.0
    %2003 = vmatmul.mubr.f32.gmra.mrb[0].mxu0 %v1911
    %v2004 = vpop.f32.mrb[0].mxu0
    %v2005 = vadd.f32 0.0, %v2004
    %v2006 = vpop.f32.mrb[0].mxu0
    %2007 = vdwg.mxu0
    %v2008 = vmul.f32 %v1980, %v1860
    %v2009 = vmul.f32 %v1985, %v1865
    %v2010 = vmul.f32 %v1990, %v1870
    %v2011 = vmul.f32 %v1995, %v1875
    %v2012 = vmul.f32 %v2000, %v1880
    %v2013 = vmul.f32 %v2005, %v1885
    %v2014 = vld [vmem:[#allocation10] sm:$0x1]
    %v2016 = vlaneseq
    %v2017 = vshrl.u32 %v2016, 7
    %v2018 = vsub.s32 0, %v2017
    %v2019 = vrot.slane %v2014, %v2018
    %2021 = vmatprep.subr.mxu0 0.0
    %2022 = vmatpush1.msra.mxu0 %v2008
    %2023 = vmatprep.subr.mxu0 0.0
    %2024 = vmatpush1.msra.mxu0 %v2009
    %2025 = vmatprep.subr.mxu0 0.0
    %2026 = vmatpush1.msra.mxu0 %v2010
    %2027 = vmatprep.subr.mxu0 0.0
    %2028 = vmatpush1.msra.mxu0 %v2011
    %2029 = vmatprep.subr.mxu0 0.0
    %2030 = vmatpush1.msra.mxu0 %v2012
    %2031 = vmatprep.subr.mxu0 0.0
    %2032 = vmatpush1.msra.mxu0 %v2013
    %2033 = vmatprep.subr.mxu0 0.0
    %2034 = vmatpush1.msra.mxu0 0.0
    %2035 = vmatprep.subr.mxu0 0.0
    %2036 = vmatpush1.msra.mxu0 0.0
    %2037 = vmatprep.subr.mxu0 0.0
    %2038 = vmatpush1.msra.mxu0 0.0
    %2039 = vmatprep.subr.mxu0 0.0
    %2040 = vmatpush1.msra.mxu0 0.0
    %2041 = vmatprep.subr.mxu0 0.0
    %2042 = vmatpush1.msra.mxu0 0.0
    %2043 = vmatprep.subr.mxu0 0.0
    %2044 = vmatpush1.msra.mxu0 0.0
    %2045 = vmatprep.subr.mxu0 0.0
    %2046 = vmatpush1.msra.mxu0 0.0
    %2047 = vmatprep.subr.mxu0 0.0
    %2048 = vmatpush1.msra.mxu0 0.0
    %2049 = vmatprep.subr.mxu0 0.0
    %2050 = vmatpush1.msra.mxu0 0.0
    %2051 = vmatprep.subr.mxu0 0.0
    %2052 = vmatpush1.msra.mxu0 0.0
    %2053 = vmatprep.subr.mxu0 0.0
    %2054 = vmatpush1.msra.mxu0 0.0
    %2055 = vmatprep.subr.mxu0 0.0
    %2056 = vmatpush1.msra.mxu0 0.0
    %2057 = vmatprep.subr.mxu0 0.0
    %2058 = vmatpush1.msra.mxu0 0.0
    %2059 = vmatprep.subr.mxu0 0.0
    %2060 = vmatpush1.msra.mxu0 0.0
    %2061 = vmatprep.subr.mxu0 0.0
    %2062 = vmatpush1.msra.mxu0 0.0
    %2063 = vmatprep.subr.mxu0 0.0
    %2064 = vmatpush1.msra.mxu0 0.0
    %2065 = vmatprep.subr.mxu0 0.0
    %2066 = vmatpush1.msra.mxu0 0.0
    %2067 = vmatprep.subr.mxu0 0.0
    %2068 = vmatpush1.msra.mxu0 0.0
    %2069 = vmatprep.subr.mxu0 0.0
    %2070 = vmatpush1.msra.mxu0 0.0
    %2071 = vmatprep.subr.mxu0 0.0
    %2072 = vmatpush1.msra.mxu0 0.0
    %2073 = vmatprep.subr.mxu0 0.0
    %2074 = vmatpush1.msra.mxu0 0.0
    %2075 = vmatprep.subr.mxu0 0.0
    %2076 = vmatpush1.msra.mxu0 0.0
    %2077 = vmatprep.subr.mxu0 0.0
    %2078 = vmatpush1.msra.mxu0 0.0
    %2079 = vmatprep.subr.mxu0 0.0
    %2080 = vmatpush1.msra.mxu0 0.0
    %2081 = vmatprep.subr.mxu0 0.0
    %2082 = vmatpush1.msra.mxu0 0.0
    %2083 = vmatprep.subr.mxu0 0.0
    %2084 = vmatpush1.msra.mxu0 0.0
    %2085 = vmatprep.mubr.f32.mxu0 0.0
    %2086 = vmatmul.mubr.f32.gmra.mrb[0].mxu0 %v678
    %v2087 = vpop.f32.mrb[0].mxu0
    %v2088 = vadd.f32 %v2019, %v2087
    %v2089 = vpop.f32.mrb[0].mxu0
    %2090 = vmatprep.mubr.f32.mxu0 0.0
    %2091 = vmatmul.mubr.f32.gmra.mrb[0].mxu0 %v681
    %v2092 = vpop.f32.mrb[0].mxu0
    %v2093 = vadd.f32 %v2019, %v2092
    %v2094 = vpop.f32.mrb[0].mxu0
    %2095 = vdwg.mxu0
    %2096 = vst [vmem:[#allocation11] sm:$0xff] %v2088
    %2097 = vst [vmem:[#allocation11 + $0x8] sm:$0xff] %v2093
    %2098 = vst.msk [vmem:[%s11] sm:$0xff] %vm640, %v1787
    %2099 = vst.msk [vmem:[%s11 + $0x8] sm:$0xff] %vm640, %v1788
    %2100 = vst.msk [vmem:[%s11 + $0x10] sm:$0xff] %vm640, %v1789
    %2101 = vst.msk [vmem:[%s11 + $0x18] sm:$0xff] %vm640, %v1790
    %2102 = vst.msk [vmem:[%s11 + $0x20] sm:$0xff] %vm640, %v1791
    %2103 = vst.msk [vmem:[%s11 + $0x28] sm:$0xff] %vm640, %v1792
    // Predicated region
    $region62: #{tpu_custom_call.1} parent=1 // pred_check
      _
    $region63: #{tpu_custom_call.1} parent=1 // pred_check_branch
      %2105 = sbr.rel (0) target = $region65
    $region64: #{tpu_custom_call.1} parent=1 // pred_region
      %s2107 = ssub.s32 256, 256
      %2108 = vsyncadd [#allocation4], %s2107
      %s2109 = sshll.u32 [#allocation11], 4
      %s2110 = int_to_ptr.vmem [resolvable:$true] %s2109
      %2115 = dma.vmem_to_hbm [thread:$0]  %s2110, 256, %s10, [#allocation4], 128, 128, 8
    $region65: #{tpu_custom_call.1} parent=1 // pred_fallthru
      _
    // Predicated region
    $region66: #{tpu_custom_call.1} parent=1 // pred_check
      _
    $region67: #{tpu_custom_call.1} parent=1 // pred_check_branch
      %2117 = sbr.rel (0) target = $region69
    $region68: #{tpu_custom_call.1} parent=1 // pred_region
      _
    $region69: #{tpu_custom_call.1} parent=1 // pred_fallthru
      _
    // Predicated region
    $region70: #{tpu_custom_call.1} parent=1 // pred_check
      _
    $region71: #{tpu_custom_call.1} parent=1 // pred_check_branch
      %2119 = sbr.rel (0) target = $region73
    $region72: #{tpu_custom_call.1} parent=1 // pred_region
      %2120 = dma.done [#allocation4], 256
    $region73: #{tpu_custom_call.1} parent=1 // pred_fallthru
      _
    // Predicated region
    $region74: #{tpu_custom_call.1} parent=1 // pred_check
      _
    $region75: #{tpu_custom_call.1} parent=1 // pred_check_branch
      %2122 = sbr.rel (0) target = $region77
    $region76: #{tpu_custom_call.1} parent=1 // pred_region
      _
    $region77: #{tpu_custom_call.1} parent=1 // pred_fallthru
      _
    %2123 = vsyncpa [#allocation3], 1
    %2124 = vsyncpa [#allocation6], 1
    %2125 = vsyncpa [#allocation9], 1
    %2126 = vsyncpa [#allocation4], 1

</llo_original>
